<compile_context>
chip_gen: v5e
topology: v5e:2x2
jax: 0.10.0
libtpu: 0.0.40
codegen_flags: <defaults>
</compile_context>

<pallas_src>
import functools

import jax
import jax.numpy as jnp
from jax.experimental import pallas as pl
from jax.experimental.pallas import tpu as pltpu


# ---------------------------------------------------------------------------
# Fused forward kernel (one (batch, query-tile) block per grid step)
# ---------------------------------------------------------------------------
def _fused_attention_kernel(xq_ref, xkv_ref, wq_ref, wk_ref, wv_ref,
                            rw_ref, gamma_ref, beta_ref, wout_ref, bout_ref,
                            o_ref, *, heads, dim_head, eps):
    f32 = jnp.float32
    bf16 = jnp.bfloat16
    H, D = heads, dim_head

    xq = xq_ref[...].astype(bf16)       # (tq, dim)  query rows of this tile
    xkv = xkv_ref[...].astype(bf16)     # (N,  dim)  full sequence (keys/values)

    # --- QKV projections on the MXU (bf16 operands, fp32 accumulation). ------
    # The softmax scale (dim_head ** -0.5) is folded into wq outside the kernel.
    q = jnp.dot(xq, wq_ref[...], preferred_element_type=f32)    # (tq, H*D)
    k = jnp.dot(xkv, wk_ref[...], preferred_element_type=f32)   # (N,  H*D)
    v = jnp.dot(xkv, wv_ref[...], preferred_element_type=f32)   # (N,  H*D)
    q = q.astype(bf16)
    k = k.astype(bf16)
    v = v.astype(bf16)

    # --- Per-head attention probabilities (softmax kept in fp32). ------------
    attn = []
    vh = []
    for h in range(H):
        q_h = q[:, h * D:(h + 1) * D]                 # (tq, D)
        k_h = k[:, h * D:(h + 1) * D]                 # (N,  D)
        vh.append(v[:, h * D:(h + 1) * D])            # (N,  D)
        dots = jax.lax.dot_general(                   # q_h @ k_h.T -> (tq, N)
            q_h, k_h, (((1,), (1,)), ((), ())),
            preferred_element_type=f32)
        dots = dots - jnp.max(dots, axis=-1, keepdims=True)
        e = jnp.exp(dots)
        inv = pl.reciprocal(jnp.sum(e, axis=-1, keepdims=True), approx=True)
        attn.append(e * inv)                          # (tq, N) fp32

    # --- Re-attention head mixing: mixed[g] = sum_h attn[h] * W[h, g]. -------
    # Done as H*H VPU scaled-adds with W in SMEM (cheap scalar reads); avoids
    # the (H, N*N) reshape/relayout and an under-filled MXU matmul.
    mixed = []
    for g in range(H):
        acc = attn[0] * rw_ref[0, g]
        for h in range(1, H):
            acc = acc + attn[h] * rw_ref[h, g]
        mixed.append(acc)

    # --- LayerNorm over the head axis, per (i, j) position (fp32, EUP rsqrt).
    mean = mixed[0]
    for g in range(1, H):
        mean = mean + mixed[g]
    mean = mean * (1.0 / H)
    var = (mixed[0] - mean) * (mixed[0] - mean)
    for g in range(1, H):
        d = mixed[g] - mean
        var = var + d * d
    var = var * (1.0 / H)
    rstd = jax.lax.rsqrt(var + eps)

    # --- attn @ v per head, concatenated into a lane-dense (tq, H*D) block. --
    outs = []
    for g in range(H):
        a_g = ((mixed[g] - mean) * rstd) * gamma_ref[g] + beta_ref[g]   # (tq, N)
        outs.append(jnp.dot(a_g.astype(bf16), vh[g],
                            preferred_element_type=f32))                # (tq, D)
    out = jnp.concatenate(outs, axis=-1).astype(bf16)                   # (tq, H*D)

    # --- Output projection (+ bias); Dropout(p=0) is identity. ---------------
    y = jnp.dot(out, wout_ref[...], preferred_element_type=f32) + bout_ref[...]
    o_ref[...] = y.astype(o_ref.dtype)


def _pick_q_tile(n, target=256):
    """Largest query tile <= target that divides n and is a multiple of 8."""
    if n <= target:
        return n
    t = (target // 8) * 8
    while t >= 8:
        if n % t == 0:
            return t
        t -= 8
    return n


# ---------------------------------------------------------------------------
# Full forward (mirrors Attention.forward)
# ---------------------------------------------------------------------------
def attention_forward(x, params, heads, dim_head, *, q_tile=256):
    B, N, dim = x.shape
    inner = heads * dim_head
    scale = dim_head ** (-0.5)
    bf16 = jnp.bfloat16

    # Split the fused QKV weight and pre-cast MXU operands to bf16.  The softmax
    # scale is folded into wq (cheaper than scaling the (H,N,N) score matrix).
    w_qkv = params["w_qkv"]
    wq = (w_qkv[:, :inner] * scale).astype(bf16)
    wk = w_qkv[:, inner:2 * inner].astype(bf16)
    wv = w_qkv[:, 2 * inner:].astype(bf16)
    w_out = params["w_out"].astype(bf16)
    b_out = params["b_out"].reshape(1, dim).astype(jnp.float32)
    rw = params["reattn_w"].astype(jnp.float32)          # (H, H) -> SMEM
    gamma = params["ln_gamma"].astype(jnp.float32)        # (H,)   -> SMEM
    beta = params["ln_beta"].astype(jnp.float32)          # (H,)   -> SMEM

    tq = _pick_q_tile(N, q_tile)
    grid = (B, N // tq)

    kern = functools.partial(_fused_attention_kernel,
                             heads=heads, dim_head=dim_head, eps=1e-5)

    flops = int(
        2 * B * N * dim * (3 * inner)            # qkv projections
        + 4 * B * heads * N * N * dim_head       # q@k^T and attn@v
        + 2 * B * heads * heads * N * N          # head re-mixing
        + 2 * B * N * inner * dim                # output projection
    )
    transcendentals = int(B * heads * N * N + B * N * N + B * heads * N)
    bytes_accessed = int(
        4 * x.size * 2
        + 2 * (wq.size + wk.size + wv.size + w_out.size)
        + 4 * (rw.size + gamma.size + beta.size + b_out.size)
        + 4 * B * N * dim
    )

    return pl.pallas_call(
        kern,
        out_shape=jax.ShapeDtypeStruct((B, N, dim), x.dtype),
        grid=grid,
        in_specs=[
            pl.BlockSpec((None, tq, dim), lambda b, i: (b, i, 0)),   # x (query rows)
            pl.BlockSpec((None, N, dim), lambda b, i: (b, 0, 0)),    # x (key/value rows)
            pl.BlockSpec((dim, inner), lambda b, i: (0, 0)),         # wq (scaled, bf16)
            pl.BlockSpec((dim, inner), lambda b, i: (0, 0)),         # wk (bf16)
            pl.BlockSpec((dim, inner), lambda b, i: (0, 0)),         # wv (bf16)
            pl.BlockSpec(memory_space=pltpu.MemorySpace.SMEM),       # reattn weights
            pl.BlockSpec(memory_space=pltpu.MemorySpace.SMEM),       # LN gamma
            pl.BlockSpec(memory_space=pltpu.MemorySpace.SMEM),       # LN beta
            pl.BlockSpec((inner, dim), lambda b, i: (0, 0)),         # w_out (bf16)
            pl.BlockSpec((1, dim), lambda b, i: (0, 0)),             # b_out (fp32)
        ],
        out_specs=pl.BlockSpec((None, tq, dim), lambda b, i: (b, i, 0)),
        compiler_params=pltpu.CompilerParams(
            dimension_semantics=("parallel", "parallel")),
        cost_estimate=pl.CostEstimate(flops=flops,
                                      transcendentals=transcendentals,
                                      bytes_accessed=bytes_accessed),
    )(x, x, wq, wk, wv, rw, gamma, beta, w_out, b_out)


# ---------------------------------------------------------------------------
# Pure-JAX fp32 reference (for correctness check)
# ---------------------------------------------------------------------------
def attention_reference(x, params, heads, dim_head):
    B, N, dim = x.shape
    inner = heads * dim_head
    scale = dim_head ** (-0.5)
    qkv = x @ params["w_qkv"]
    q, k, v = jnp.split(qkv, 3, axis=-1)

    def reh(t):
        return jnp.transpose(t.reshape(B, N, heads, dim_head), (0, 2, 1, 3))

    q, k, v = map(reh, (q, k, v))
    dots = jnp.einsum("bhid,bhjd->bhij", q, k) * scale
    attn = jax.nn.softmax(dots, axis=-1)
    attn = jnp.einsum("bhij,hg->bgij", attn, params["reattn_w"])
    mu = attn.mean(axis=1, keepdims=True)
    var = ((attn - mu) ** 2).mean(axis=1, keepdims=True)
    attn = (attn - mu) / jnp.sqrt(var + 1e-5)
    attn = (attn * params["ln_gamma"][None, :, None, None]
            + params["ln_beta"][None, :, None, None])
    out = jnp.einsum("bhij,bhjd->bhid", attn, v)
    out = jnp.transpose(out, (0, 2, 1, 3)).reshape(B, N, inner)
    return out @ params["w_out"] + params["b_out"]


# ---------------------------------------------------------------------------
if __name__ == "__main__":
    B, N, DIM = 2, 8, 32
    HEADS, DIM_HEAD = 8, 16
    INNER = HEADS * DIM_HEAD

    key = jax.random.PRNGKey(0)
    k1, k2, k3, k4, k5 = jax.random.split(key, 5)

    # Deterministic synthetic parameters (shapes per module __init__).
    params = {
        "w_qkv": jax.random.normal(k1, (DIM, 3 * INNER), jnp.float32) * 0.05,
        "reattn_w": jax.random.normal(k2, (HEADS, HEADS), jnp.float32),
        "ln_gamma": jnp.ones((HEADS,), jnp.float32),
        "ln_beta": jnp.zeros((HEADS,), jnp.float32),
        "w_out": jax.random.normal(k3, (INNER, DIM), jnp.float32) * 0.05,
        "b_out": jax.random.normal(k4, (DIM,), jnp.float32) * 0.05,
    }

    x = jax.random.normal(k5, (B, N, DIM), jnp.float32)

    out = attention_forward(x, params, HEADS, DIM_HEAD)
    out = jax.block_until_ready(out)

    ref = attention_reference(x, params, HEADS, DIM_HEAD)
    assert out.shape == (B, N, DIM)
    # bf16 MXU operands + approximate softmax reciprocal -> slightly looser
    # tolerance than the pure-fp32 reference.
    max_err = float(jnp.max(jnp.abs(out - ref)))
    assert jnp.allclose(out, ref, atol=2e-2, rtol=2e-2), (
        f"mismatch vs reference (max abs err {max_err})")

    print("KERNEL_OK")
</pallas_src>

<mosaic_0001>
module attributes {stable_mosaic.version = 11 : i64} {
  func.func @_fused_attention_kernel(%arg0: i32, %arg1: i32, %arg2: memref<1x8x32xf32, #tpu.memory_space<vmem>>, %arg3: memref<1x8x32xf32, #tpu.memory_space<vmem>>, %arg4: memref<32x128xbf16, #tpu.memory_space<vmem>>, %arg5: memref<32x128xbf16, #tpu.memory_space<vmem>>, %arg6: memref<32x128xbf16, #tpu.memory_space<vmem>>, %arg7: memref<8x8xf32, #tpu.memory_space<smem>>, %arg8: memref<8xf32, #tpu.memory_space<smem>>, %arg9: memref<8xf32, #tpu.memory_space<smem>>, %arg10: memref<128x32xbf16, #tpu.memory_space<vmem>>, %arg11: memref<1x32xf32, #tpu.memory_space<vmem>>, %arg12: memref<1x8x32xf32, #tpu.memory_space<vmem>>) attributes {dimension_semantics = [#tpu.dimension_semantics<parallel>, #tpu.dimension_semantics<parallel>], iteration_bounds = array<i64: 2, 1>, scalar_prefetch = 0 : i64, scratch_operands = 0 : i64, tpu.core_type = #tpu.core_type<tc>, window_params = [{transform_indices = @transform_0, window_bounds = array<i64: 1, 8, 32>}, {transform_indices = @transform_1, window_bounds = array<i64: 1, 8, 32>}, {pipeline_mode = #tpu.pipeline_mode<synchronous>, transform_indices = @transform_2, window_bounds = array<i64: 32, 128>}, {pipeline_mode = #tpu.pipeline_mode<synchronous>, transform_indices = @transform_3, window_bounds = array<i64: 32, 128>}, {pipeline_mode = #tpu.pipeline_mode<synchronous>, transform_indices = @transform_4, window_bounds = array<i64: 32, 128>}, {transform_indices = @transform_5, window_bounds = array<i64: 8, 8>}, {transform_indices = @transform_6, window_bounds = array<i64: 8>}, {transform_indices = @transform_7, window_bounds = array<i64: 8>}, {pipeline_mode = #tpu.pipeline_mode<synchronous>, transform_indices = @transform_8, window_bounds = array<i64: 128, 32>}, {pipeline_mode = #tpu.pipeline_mode<synchronous>, transform_indices = @transform_9, window_bounds = array<i64: 1, 32>}, {transform_indices = @transform_10, window_bounds = array<i64: 1, 8, 32>}]} {
    %c0 = arith.constant 0 : index
    %c0_0 = arith.constant 0 : index
    %c0_1 = arith.constant 0 : index
    %0 = vector.load %arg2[%c0, %c0_0, %c0_1] : memref<1x8x32xf32, #tpu.memory_space<vmem>>, vector<1x8x32xf32>
    %1 = vector.shape_cast %0 : vector<1x8x32xf32> to vector<8x32xf32>
    %2 = arith.truncf %1 : vector<8x32xf32> to vector<8x32xbf16>
    %c0_2 = arith.constant 0 : index
    %c0_3 = arith.constant 0 : index
    %c0_4 = arith.constant 0 : index
    %3 = vector.load %arg3[%c0_2, %c0_3, %c0_4] : memref<1x8x32xf32, #tpu.memory_space<vmem>>, vector<1x8x32xf32>
    %4 = vector.shape_cast %3 : vector<1x8x32xf32> to vector<8x32xf32>
    %5 = arith.truncf %4 : vector<8x32xf32> to vector<8x32xbf16>
    %c0_5 = arith.constant 0 : index
    %c0_6 = arith.constant 0 : index
    %6 = vector.load %arg4[%c0_5, %c0_6] : memref<32x128xbf16, #tpu.memory_space<vmem>>, vector<32x128xbf16>
    %cst = arith.constant dense<0.000000e+00> : vector<8x128xf32>
    %7 = tpu.matmul %2, %6, %cst {dimension_numbers = #tpu.dot_dimension_numbers<[1], [0], [0], [1], [0, 0, 1, 1], [], []>} : vector<8x32xbf16>, vector<32x128xbf16>, vector<8x128xf32> -> vector<8x128xf32>
    %c0_7 = arith.constant 0 : index
    %c0_8 = arith.constant 0 : index
    %8 = vector.load %arg5[%c0_7, %c0_8] : memref<32x128xbf16, #tpu.memory_space<vmem>>, vector<32x128xbf16>
    %cst_9 = arith.constant dense<0.000000e+00> : vector<8x128xf32>
    %9 = tpu.matmul %5, %8, %cst_9 {dimension_numbers = #tpu.dot_dimension_numbers<[1], [0], [0], [1], [0, 0, 1, 1], [], []>} : vector<8x32xbf16>, vector<32x128xbf16>, vector<8x128xf32> -> vector<8x128xf32>
    %c0_10 = arith.constant 0 : index
    %c0_11 = arith.constant 0 : index
    %10 = vector.load %arg6[%c0_10, %c0_11] : memref<32x128xbf16, #tpu.memory_space<vmem>>, vector<32x128xbf16>
    %cst_12 = arith.constant dense<0.000000e+00> : vector<8x128xf32>
    %11 = tpu.matmul %5, %10, %cst_12 {dimension_numbers = #tpu.dot_dimension_numbers<[1], [0], [0], [1], [0, 0, 1, 1], [], []>} : vector<8x32xbf16>, vector<32x128xbf16>, vector<8x128xf32> -> vector<8x128xf32>
    %12 = arith.truncf %7 : vector<8x128xf32> to vector<8x128xbf16>
    %13 = arith.truncf %9 : vector<8x128xf32> to vector<8x128xbf16>
    %14 = arith.truncf %11 : vector<8x128xf32> to vector<8x128xbf16>
    %15 = vector.extract_strided_slice %12 {offsets = [0, 0], sizes = [8, 16], strides = [1, 1]} : vector<8x128xbf16> to vector<8x16xbf16>
    %16 = vector.extract_strided_slice %13 {offsets = [0, 0], sizes = [8, 16], strides = [1, 1]} : vector<8x128xbf16> to vector<8x16xbf16>
    %17 = vector.extract_strided_slice %14 {offsets = [0, 0], sizes = [8, 16], strides = [1, 1]} : vector<8x128xbf16> to vector<8x16xbf16>
    %cst_13 = arith.constant dense<0.000000e+00> : vector<8x8xf32>
    %18 = tpu.matmul %15, %16, %cst_13 {dimension_numbers = #tpu.dot_dimension_numbers<[1], [1], [0], [0], [0, 0, 1, 0], [], []>} : vector<8x16xbf16>, vector<8x16xbf16>, vector<8x8xf32> -> vector<8x8xf32>
    %cst_14 = arith.constant dense<0xFF800000> : vector<8xf32>
    %19 = vector.multi_reduction <maximumf>, %18, %cst_14 [1] : vector<8x8xf32> to vector<8xf32>
    %20 = vector.shape_cast %19 : vector<8xf32> to vector<8x1xf32>
    %21 = vector.broadcast %20 : vector<8x1xf32> to vector<8x8xf32>
    %22 = arith.subf %18, %21 : vector<8x8xf32>
    %23 = math.exp %22 : vector<8x8xf32>
    %cst_15 = arith.constant dense<0.000000e+00> : vector<8xf32>
    %24 = vector.multi_reduction <add>, %23, %cst_15 [1] : vector<8x8xf32> to vector<8xf32>
    %25 = vector.shape_cast %24 : vector<8xf32> to vector<8x1xf32>
    %26 = tpu.reciprocal %25 {approx = true} : vector<8x1xf32> -> vector<8x1xf32>
    %27 = vector.broadcast %26 : vector<8x1xf32> to vector<8x8xf32>
    %28 = arith.mulf %23, %27 : vector<8x8xf32>
    %29 = vector.extract_strided_slice %12 {offsets = [0, 16], sizes = [8, 16], strides = [1, 1]} : vector<8x128xbf16> to vector<8x16xbf16>
    %30 = vector.extract_strided_slice %13 {offsets = [0, 16], sizes = [8, 16], strides = [1, 1]} : vector<8x128xbf16> to vector<8x16xbf16>
    %31 = vector.extract_strided_slice %14 {offsets = [0, 16], sizes = [8, 16], strides = [1, 1]} : vector<8x128xbf16> to vector<8x16xbf16>
    %cst_16 = arith.constant dense<0.000000e+00> : vector<8x8xf32>
    %32 = tpu.matmul %29, %30, %cst_16 {dimension_numbers = #tpu.dot_dimension_numbers<[1], [1], [0], [0], [0, 0, 1, 0], [], []>} : vector<8x16xbf16>, vector<8x16xbf16>, vector<8x8xf32> -> vector<8x8xf32>
    %cst_17 = arith.constant dense<0xFF800000> : vector<8xf32>
    %33 = vector.multi_reduction <maximumf>, %32, %cst_17 [1] : vector<8x8xf32> to vector<8xf32>
    %34 = vector.shape_cast %33 : vector<8xf32> to vector<8x1xf32>
    %35 = vector.broadcast %34 : vector<8x1xf32> to vector<8x8xf32>
    %36 = arith.subf %32, %35 : vector<8x8xf32>
    %37 = math.exp %36 : vector<8x8xf32>
    %cst_18 = arith.constant dense<0.000000e+00> : vector<8xf32>
    %38 = vector.multi_reduction <add>, %37, %cst_18 [1] : vector<8x8xf32> to vector<8xf32>
    %39 = vector.shape_cast %38 : vector<8xf32> to vector<8x1xf32>
    %40 = tpu.reciprocal %39 {approx = true} : vector<8x1xf32> -> vector<8x1xf32>
    %41 = vector.broadcast %40 : vector<8x1xf32> to vector<8x8xf32>
    %42 = arith.mulf %37, %41 : vector<8x8xf32>
    %43 = vector.extract_strided_slice %12 {offsets = [0, 32], sizes = [8, 16], strides = [1, 1]} : vector<8x128xbf16> to vector<8x16xbf16>
    %44 = vector.extract_strided_slice %13 {offsets = [0, 32], sizes = [8, 16], strides = [1, 1]} : vector<8x128xbf16> to vector<8x16xbf16>
    %45 = vector.extract_strided_slice %14 {offsets = [0, 32], sizes = [8, 16], strides = [1, 1]} : vector<8x128xbf16> to vector<8x16xbf16>
    %cst_19 = arith.constant dense<0.000000e+00> : vector<8x8xf32>
    %46 = tpu.matmul %43, %44, %cst_19 {dimension_numbers = #tpu.dot_dimension_numbers<[1], [1], [0], [0], [0, 0, 1, 0], [], []>} : vector<8x16xbf16>, vector<8x16xbf16>, vector<8x8xf32> -> vector<8x8xf32>
    %cst_20 = arith.constant dense<0xFF800000> : vector<8xf32>
    %47 = vector.multi_reduction <maximumf>, %46, %cst_20 [1] : vector<8x8xf32> to vector<8xf32>
    %48 = vector.shape_cast %47 : vector<8xf32> to vector<8x1xf32>
    %49 = vector.broadcast %48 : vector<8x1xf32> to vector<8x8xf32>
    %50 = arith.subf %46, %49 : vector<8x8xf32>
    %51 = math.exp %50 : vector<8x8xf32>
    %cst_21 = arith.constant dense<0.000000e+00> : vector<8xf32>
    %52 = vector.multi_reduction <add>, %51, %cst_21 [1] : vector<8x8xf32> to vector<8xf32>
    %53 = vector.shape_cast %52 : vector<8xf32> to vector<8x1xf32>
    %54 = tpu.reciprocal %53 {approx = true} : vector<8x1xf32> -> vector<8x1xf32>
    %55 = vector.broadcast %54 : vector<8x1xf32> to vector<8x8xf32>
    %56 = arith.mulf %51, %55 : vector<8x8xf32>
    %57 = vector.extract_strided_slice %12 {offsets = [0, 48], sizes = [8, 16], strides = [1, 1]} : vector<8x128xbf16> to vector<8x16xbf16>
    %58 = vector.extract_strided_slice %13 {offsets = [0, 48], sizes = [8, 16], strides = [1, 1]} : vector<8x128xbf16> to vector<8x16xbf16>
    %59 = vector.extract_strided_slice %14 {offsets = [0, 48], sizes = [8, 16], strides = [1, 1]} : vector<8x128xbf16> to vector<8x16xbf16>
    %cst_22 = arith.constant dense<0.000000e+00> : vector<8x8xf32>
    %60 = tpu.matmul %57, %58, %cst_22 {dimension_numbers = #tpu.dot_dimension_numbers<[1], [1], [0], [0], [0, 0, 1, 0], [], []>} : vector<8x16xbf16>, vector<8x16xbf16>, vector<8x8xf32> -> vector<8x8xf32>
    %cst_23 = arith.constant dense<0xFF800000> : vector<8xf32>
    %61 = vector.multi_reduction <maximumf>, %60, %cst_23 [1] : vector<8x8xf32> to vector<8xf32>
    %62 = vector.shape_cast %61 : vector<8xf32> to vector<8x1xf32>
    %63 = vector.broadcast %62 : vector<8x1xf32> to vector<8x8xf32>
    %64 = arith.subf %60, %63 : vector<8x8xf32>
    %65 = math.exp %64 : vector<8x8xf32>
    %cst_24 = arith.constant dense<0.000000e+00> : vector<8xf32>
    %66 = vector.multi_reduction <add>, %65, %cst_24 [1] : vector<8x8xf32> to vector<8xf32>
    %67 = vector.shape_cast %66 : vector<8xf32> to vector<8x1xf32>
    %68 = tpu.reciprocal %67 {approx = true} : vector<8x1xf32> -> vector<8x1xf32>
    %69 = vector.broadcast %68 : vector<8x1xf32> to vector<8x8xf32>
    %70 = arith.mulf %65, %69 : vector<8x8xf32>
    %71 = vector.extract_strided_slice %12 {offsets = [0, 64], sizes = [8, 16], strides = [1, 1]} : vector<8x128xbf16> to vector<8x16xbf16>
    %72 = vector.extract_strided_slice %13 {offsets = [0, 64], sizes = [8, 16], strides = [1, 1]} : vector<8x128xbf16> to vector<8x16xbf16>
    %73 = vector.extract_strided_slice %14 {offsets = [0, 64], sizes = [8, 16], strides = [1, 1]} : vector<8x128xbf16> to vector<8x16xbf16>
    %cst_25 = arith.constant dense<0.000000e+00> : vector<8x8xf32>
    %74 = tpu.matmul %71, %72, %cst_25 {dimension_numbers = #tpu.dot_dimension_numbers<[1], [1], [0], [0], [0, 0, 1, 0], [], []>} : vector<8x16xbf16>, vector<8x16xbf16>, vector<8x8xf32> -> vector<8x8xf32>
    %cst_26 = arith.constant dense<0xFF800000> : vector<8xf32>
    %75 = vector.multi_reduction <maximumf>, %74, %cst_26 [1] : vector<8x8xf32> to vector<8xf32>
    %76 = vector.shape_cast %75 : vector<8xf32> to vector<8x1xf32>
    %77 = vector.broadcast %76 : vector<8x1xf32> to vector<8x8xf32>
    %78 = arith.subf %74, %77 : vector<8x8xf32>
    %79 = math.exp %78 : vector<8x8xf32>
    %cst_27 = arith.constant dense<0.000000e+00> : vector<8xf32>
    %80 = vector.multi_reduction <add>, %79, %cst_27 [1] : vector<8x8xf32> to vector<8xf32>
    %81 = vector.shape_cast %80 : vector<8xf32> to vector<8x1xf32>
    %82 = tpu.reciprocal %81 {approx = true} : vector<8x1xf32> -> vector<8x1xf32>
    %83 = vector.broadcast %82 : vector<8x1xf32> to vector<8x8xf32>
    %84 = arith.mulf %79, %83 : vector<8x8xf32>
    %85 = vector.extract_strided_slice %12 {offsets = [0, 80], sizes = [8, 16], strides = [1, 1]} : vector<8x128xbf16> to vector<8x16xbf16>
    %86 = vector.extract_strided_slice %13 {offsets = [0, 80], sizes = [8, 16], strides = [1, 1]} : vector<8x128xbf16> to vector<8x16xbf16>
    %87 = vector.extract_strided_slice %14 {offsets = [0, 80], sizes = [8, 16], strides = [1, 1]} : vector<8x128xbf16> to vector<8x16xbf16>
    %cst_28 = arith.constant dense<0.000000e+00> : vector<8x8xf32>
    %88 = tpu.matmul %85, %86, %cst_28 {dimension_numbers = #tpu.dot_dimension_numbers<[1], [1], [0], [0], [0, 0, 1, 0], [], []>} : vector<8x16xbf16>, vector<8x16xbf16>, vector<8x8xf32> -> vector<8x8xf32>
    %cst_29 = arith.constant dense<0xFF800000> : vector<8xf32>
    %89 = vector.multi_reduction <maximumf>, %88, %cst_29 [1] : vector<8x8xf32> to vector<8xf32>
    %90 = vector.shape_cast %89 : vector<8xf32> to vector<8x1xf32>
    %91 = vector.broadcast %90 : vector<8x1xf32> to vector<8x8xf32>
    %92 = arith.subf %88, %91 : vector<8x8xf32>
    %93 = math.exp %92 : vector<8x8xf32>
    %cst_30 = arith.constant dense<0.000000e+00> : vector<8xf32>
    %94 = vector.multi_reduction <add>, %93, %cst_30 [1] : vector<8x8xf32> to vector<8xf32>
    %95 = vector.shape_cast %94 : vector<8xf32> to vector<8x1xf32>
    %96 = tpu.reciprocal %95 {approx = true} : vector<8x1xf32> -> vector<8x1xf32>
    %97 = vector.broadcast %96 : vector<8x1xf32> to vector<8x8xf32>
    %98 = arith.mulf %93, %97 : vector<8x8xf32>
    %99 = vector.extract_strided_slice %12 {offsets = [0, 96], sizes = [8, 16], strides = [1, 1]} : vector<8x128xbf16> to vector<8x16xbf16>
    %100 = vector.extract_strided_slice %13 {offsets = [0, 96], sizes = [8, 16], strides = [1, 1]} : vector<8x128xbf16> to vector<8x16xbf16>
    %101 = vector.extract_strided_slice %14 {offsets = [0, 96], sizes = [8, 16], strides = [1, 1]} : vector<8x128xbf16> to vector<8x16xbf16>
    %cst_31 = arith.constant dense<0.000000e+00> : vector<8x8xf32>
    %102 = tpu.matmul %99, %100, %cst_31 {dimension_numbers = #tpu.dot_dimension_numbers<[1], [1], [0], [0], [0, 0, 1, 0], [], []>} : vector<8x16xbf16>, vector<8x16xbf16>, vector<8x8xf32> -> vector<8x8xf32>
    %cst_32 = arith.constant dense<0xFF800000> : vector<8xf32>
    %103 = vector.multi_reduction <maximumf>, %102, %cst_32 [1] : vector<8x8xf32> to vector<8xf32>
    %104 = vector.shape_cast %103 : vector<8xf32> to vector<8x1xf32>
    %105 = vector.broadcast %104 : vector<8x1xf32> to vector<8x8xf32>
    %106 = arith.subf %102, %105 : vector<8x8xf32>
    %107 = math.exp %106 : vector<8x8xf32>
    %cst_33 = arith.constant dense<0.000000e+00> : vector<8xf32>
    %108 = vector.multi_reduction <add>, %107, %cst_33 [1] : vector<8x8xf32> to vector<8xf32>
    %109 = vector.shape_cast %108 : vector<8xf32> to vector<8x1xf32>
    %110 = tpu.reciprocal %109 {approx = true} : vector<8x1xf32> -> vector<8x1xf32>
    %111 = vector.broadcast %110 : vector<8x1xf32> to vector<8x8xf32>
    %112 = arith.mulf %107, %111 : vector<8x8xf32>
    %113 = vector.extract_strided_slice %12 {offsets = [0, 112], sizes = [8, 16], strides = [1, 1]} : vector<8x128xbf16> to vector<8x16xbf16>
    %114 = vector.extract_strided_slice %13 {offsets = [0, 112], sizes = [8, 16], strides = [1, 1]} : vector<8x128xbf16> to vector<8x16xbf16>
    %115 = vector.extract_strided_slice %14 {offsets = [0, 112], sizes = [8, 16], strides = [1, 1]} : vector<8x128xbf16> to vector<8x16xbf16>
    %cst_34 = arith.constant dense<0.000000e+00> : vector<8x8xf32>
    %116 = tpu.matmul %113, %114, %cst_34 {dimension_numbers = #tpu.dot_dimension_numbers<[1], [1], [0], [0], [0, 0, 1, 0], [], []>} : vector<8x16xbf16>, vector<8x16xbf16>, vector<8x8xf32> -> vector<8x8xf32>
    %cst_35 = arith.constant dense<0xFF800000> : vector<8xf32>
    %117 = vector.multi_reduction <maximumf>, %116, %cst_35 [1] : vector<8x8xf32> to vector<8xf32>
    %118 = vector.shape_cast %117 : vector<8xf32> to vector<8x1xf32>
    %119 = vector.broadcast %118 : vector<8x1xf32> to vector<8x8xf32>
    %120 = arith.subf %116, %119 : vector<8x8xf32>
    %121 = math.exp %120 : vector<8x8xf32>
    %cst_36 = arith.constant dense<0.000000e+00> : vector<8xf32>
    %122 = vector.multi_reduction <add>, %121, %cst_36 [1] : vector<8x8xf32> to vector<8xf32>
    %123 = vector.shape_cast %122 : vector<8xf32> to vector<8x1xf32>
    %124 = tpu.reciprocal %123 {approx = true} : vector<8x1xf32> -> vector<8x1xf32>
    %125 = vector.broadcast %124 : vector<8x1xf32> to vector<8x8xf32>
    %126 = arith.mulf %121, %125 : vector<8x8xf32>
    %c0_37 = arith.constant 0 : index
    %c0_38 = arith.constant 0 : index
    %127 = memref.load %arg7[%c0_37, %c0_38] : memref<8x8xf32, #tpu.memory_space<smem>>
    %128 = vector.broadcast %127 : f32 to vector<8x8xf32>
    %129 = arith.mulf %28, %128 : vector<8x8xf32>
    %c1 = arith.constant 1 : index
    %c0_39 = arith.constant 0 : index
    %130 = memref.load %arg7[%c1, %c0_39] : memref<8x8xf32, #tpu.memory_space<smem>>
    %131 = vector.broadcast %130 : f32 to vector<8x8xf32>
    %132 = arith.mulf %42, %131 : vector<8x8xf32>
    %133 = arith.addf %129, %132 : vector<8x8xf32>
    %c2 = arith.constant 2 : index
    %c0_40 = arith.constant 0 : index
    %134 = memref.load %arg7[%c2, %c0_40] : memref<8x8xf32, #tpu.memory_space<smem>>
    %135 = vector.broadcast %134 : f32 to vector<8x8xf32>
    %136 = arith.mulf %56, %135 : vector<8x8xf32>
    %137 = arith.addf %133, %136 : vector<8x8xf32>
    %c3 = arith.constant 3 : index
    %c0_41 = arith.constant 0 : index
    %138 = memref.load %arg7[%c3, %c0_41] : memref<8x8xf32, #tpu.memory_space<smem>>
    %139 = vector.broadcast %138 : f32 to vector<8x8xf32>
    %140 = arith.mulf %70, %139 : vector<8x8xf32>
    %141 = arith.addf %137, %140 : vector<8x8xf32>
    %c4 = arith.constant 4 : index
    %c0_42 = arith.constant 0 : index
    %142 = memref.load %arg7[%c4, %c0_42] : memref<8x8xf32, #tpu.memory_space<smem>>
    %143 = vector.broadcast %142 : f32 to vector<8x8xf32>
    %144 = arith.mulf %84, %143 : vector<8x8xf32>
    %145 = arith.addf %141, %144 : vector<8x8xf32>
    %c5 = arith.constant 5 : index
    %c0_43 = arith.constant 0 : index
    %146 = memref.load %arg7[%c5, %c0_43] : memref<8x8xf32, #tpu.memory_space<smem>>
    %147 = vector.broadcast %146 : f32 to vector<8x8xf32>
    %148 = arith.mulf %98, %147 : vector<8x8xf32>
    %149 = arith.addf %145, %148 : vector<8x8xf32>
    %c6 = arith.constant 6 : index
    %c0_44 = arith.constant 0 : index
    %150 = memref.load %arg7[%c6, %c0_44] : memref<8x8xf32, #tpu.memory_space<smem>>
    %151 = vector.broadcast %150 : f32 to vector<8x8xf32>
    %152 = arith.mulf %112, %151 : vector<8x8xf32>
    %153 = arith.addf %149, %152 : vector<8x8xf32>
    %c7 = arith.constant 7 : index
    %c0_45 = arith.constant 0 : index
    %154 = memref.load %arg7[%c7, %c0_45] : memref<8x8xf32, #tpu.memory_space<smem>>
    %155 = vector.broadcast %154 : f32 to vector<8x8xf32>
    %156 = arith.mulf %126, %155 : vector<8x8xf32>
    %157 = arith.addf %153, %156 : vector<8x8xf32>
    %c0_46 = arith.constant 0 : index
    %c1_47 = arith.constant 1 : index
    %158 = memref.load %arg7[%c0_46, %c1_47] : memref<8x8xf32, #tpu.memory_space<smem>>
    %159 = vector.broadcast %158 : f32 to vector<8x8xf32>
    %160 = arith.mulf %28, %159 : vector<8x8xf32>
    %c1_48 = arith.constant 1 : index
    %c1_49 = arith.constant 1 : index
    %161 = memref.load %arg7[%c1_48, %c1_49] : memref<8x8xf32, #tpu.memory_space<smem>>
    %162 = vector.broadcast %161 : f32 to vector<8x8xf32>
    %163 = arith.mulf %42, %162 : vector<8x8xf32>
    %164 = arith.addf %160, %163 : vector<8x8xf32>
    %c2_50 = arith.constant 2 : index
    %c1_51 = arith.constant 1 : index
    %165 = memref.load %arg7[%c2_50, %c1_51] : memref<8x8xf32, #tpu.memory_space<smem>>
    %166 = vector.broadcast %165 : f32 to vector<8x8xf32>
    %167 = arith.mulf %56, %166 : vector<8x8xf32>
    %168 = arith.addf %164, %167 : vector<8x8xf32>
    %c3_52 = arith.constant 3 : index
    %c1_53 = arith.constant 1 : index
    %169 = memref.load %arg7[%c3_52, %c1_53] : memref<8x8xf32, #tpu.memory_space<smem>>
    %170 = vector.broadcast %169 : f32 to vector<8x8xf32>
    %171 = arith.mulf %70, %170 : vector<8x8xf32>
    %172 = arith.addf %168, %171 : vector<8x8xf32>
    %c4_54 = arith.constant 4 : index
    %c1_55 = arith.constant 1 : index
    %173 = memref.load %arg7[%c4_54, %c1_55] : memref<8x8xf32, #tpu.memory_space<smem>>
    %174 = vector.broadcast %173 : f32 to vector<8x8xf32>
    %175 = arith.mulf %84, %174 : vector<8x8xf32>
    %176 = arith.addf %172, %175 : vector<8x8xf32>
    %c5_56 = arith.constant 5 : index
    %c1_57 = arith.constant 1 : index
    %177 = memref.load %arg7[%c5_56, %c1_57] : memref<8x8xf32, #tpu.memory_space<smem>>
    %178 = vector.broadcast %177 : f32 to vector<8x8xf32>
    %179 = arith.mulf %98, %178 : vector<8x8xf32>
    %180 = arith.addf %176, %179 : vector<8x8xf32>
    %c6_58 = arith.constant 6 : index
    %c1_59 = arith.constant 1 : index
    %181 = memref.load %arg7[%c6_58, %c1_59] : memref<8x8xf32, #tpu.memory_space<smem>>
    %182 = vector.broadcast %181 : f32 to vector<8x8xf32>
    %183 = arith.mulf %112, %182 : vector<8x8xf32>
    %184 = arith.addf %180, %183 : vector<8x8xf32>
    %c7_60 = arith.constant 7 : index
    %c1_61 = arith.constant 1 : index
    %185 = memref.load %arg7[%c7_60, %c1_61] : memref<8x8xf32, #tpu.memory_space<smem>>
    %186 = vector.broadcast %185 : f32 to vector<8x8xf32>
    %187 = arith.mulf %126, %186 : vector<8x8xf32>
    %188 = arith.addf %184, %187 : vector<8x8xf32>
    %c0_62 = arith.constant 0 : index
    %c2_63 = arith.constant 2 : index
    %189 = memref.load %arg7[%c0_62, %c2_63] : memref<8x8xf32, #tpu.memory_space<smem>>
    %190 = vector.broadcast %189 : f32 to vector<8x8xf32>
    %191 = arith.mulf %28, %190 : vector<8x8xf32>
    %c1_64 = arith.constant 1 : index
    %c2_65 = arith.constant 2 : index
    %192 = memref.load %arg7[%c1_64, %c2_65] : memref<8x8xf32, #tpu.memory_space<smem>>
    %193 = vector.broadcast %192 : f32 to vector<8x8xf32>
    %194 = arith.mulf %42, %193 : vector<8x8xf32>
    %195 = arith.addf %191, %194 : vector<8x8xf32>
    %c2_66 = arith.constant 2 : index
    %c2_67 = arith.constant 2 : index
    %196 = memref.load %arg7[%c2_66, %c2_67] : memref<8x8xf32, #tpu.memory_space<smem>>
    %197 = vector.broadcast %196 : f32 to vector<8x8xf32>
    %198 = arith.mulf %56, %197 : vector<8x8xf32>
    %199 = arith.addf %195, %198 : vector<8x8xf32>
    %c3_68 = arith.constant 3 : index
    %c2_69 = arith.constant 2 : index
    %200 = memref.load %arg7[%c3_68, %c2_69] : memref<8x8xf32, #tpu.memory_space<smem>>
    %201 = vector.broadcast %200 : f32 to vector<8x8xf32>
    %202 = arith.mulf %70, %201 : vector<8x8xf32>
    %203 = arith.addf %199, %202 : vector<8x8xf32>
    %c4_70 = arith.constant 4 : index
    %c2_71 = arith.constant 2 : index
    %204 = memref.load %arg7[%c4_70, %c2_71] : memref<8x8xf32, #tpu.memory_space<smem>>
    %205 = vector.broadcast %204 : f32 to vector<8x8xf32>
    %206 = arith.mulf %84, %205 : vector<8x8xf32>
    %207 = arith.addf %203, %206 : vector<8x8xf32>
    %c5_72 = arith.constant 5 : index
    %c2_73 = arith.constant 2 : index
    %208 = memref.load %arg7[%c5_72, %c2_73] : memref<8x8xf32, #tpu.memory_space<smem>>
    %209 = vector.broadcast %208 : f32 to vector<8x8xf32>
    %210 = arith.mulf %98, %209 : vector<8x8xf32>
    %211 = arith.addf %207, %210 : vector<8x8xf32>
    %c6_74 = arith.constant 6 : index
    %c2_75 = arith.constant 2 : index
    %212 = memref.load %arg7[%c6_74, %c2_75] : memref<8x8xf32, #tpu.memory_space<smem>>
    %213 = vector.broadcast %212 : f32 to vector<8x8xf32>
    %214 = arith.mulf %112, %213 : vector<8x8xf32>
    %215 = arith.addf %211, %214 : vector<8x8xf32>
    %c7_76 = arith.constant 7 : index
    %c2_77 = arith.constant 2 : index
    %216 = memref.load %arg7[%c7_76, %c2_77] : memref<8x8xf32, #tpu.memory_space<smem>>
    %217 = vector.broadcast %216 : f32 to vector<8x8xf32>
    %218 = arith.mulf %126, %217 : vector<8x8xf32>
    %219 = arith.addf %215, %218 : vector<8x8xf32>
    %c0_78 = arith.constant 0 : index
    %c3_79 = arith.constant 3 : index
    %220 = memref.load %arg7[%c0_78, %c3_79] : memref<8x8xf32, #tpu.memory_space<smem>>
    %221 = vector.broadcast %220 : f32 to vector<8x8xf32>
    %222 = arith.mulf %28, %221 : vector<8x8xf32>
    %c1_80 = arith.constant 1 : index
    %c3_81 = arith.constant 3 : index
    %223 = memref.load %arg7[%c1_80, %c3_81] : memref<8x8xf32, #tpu.memory_space<smem>>
    %224 = vector.broadcast %223 : f32 to vector<8x8xf32>
    %225 = arith.mulf %42, %224 : vector<8x8xf32>
    %226 = arith.addf %222, %225 : vector<8x8xf32>
    %c2_82 = arith.constant 2 : index
    %c3_83 = arith.constant 3 : index
    %227 = memref.load %arg7[%c2_82, %c3_83] : memref<8x8xf32, #tpu.memory_space<smem>>
    %228 = vector.broadcast %227 : f32 to vector<8x8xf32>
    %229 = arith.mulf %56, %228 : vector<8x8xf32>
    %230 = arith.addf %226, %229 : vector<8x8xf32>
    %c3_84 = arith.constant 3 : index
    %c3_85 = arith.constant 3 : index
    %231 = memref.load %arg7[%c3_84, %c3_85] : memref<8x8xf32, #tpu.memory_space<smem>>
    %232 = vector.broadcast %231 : f32 to vector<8x8xf32>
    %233 = arith.mulf %70, %232 : vector<8x8xf32>
    %234 = arith.addf %230, %233 : vector<8x8xf32>
    %c4_86 = arith.constant 4 : index
    %c3_87 = arith.constant 3 : index
    %235 = memref.load %arg7[%c4_86, %c3_87] : memref<8x8xf32, #tpu.memory_space<smem>>
    %236 = vector.broadcast %235 : f32 to vector<8x8xf32>
    %237 = arith.mulf %84, %236 : vector<8x8xf32>
    %238 = arith.addf %234, %237 : vector<8x8xf32>
    %c5_88 = arith.constant 5 : index
    %c3_89 = arith.constant 3 : index
    %239 = memref.load %arg7[%c5_88, %c3_89] : memref<8x8xf32, #tpu.memory_space<smem>>
    %240 = vector.broadcast %239 : f32 to vector<8x8xf32>
    %241 = arith.mulf %98, %240 : vector<8x8xf32>
    %242 = arith.addf %238, %241 : vector<8x8xf32>
    %c6_90 = arith.constant 6 : index
    %c3_91 = arith.constant 3 : index
    %243 = memref.load %arg7[%c6_90, %c3_91] : memref<8x8xf32, #tpu.memory_space<smem>>
    %244 = vector.broadcast %243 : f32 to vector<8x8xf32>
    %245 = arith.mulf %112, %244 : vector<8x8xf32>
    %246 = arith.addf %242, %245 : vector<8x8xf32>
    %c7_92 = arith.constant 7 : index
    %c3_93 = arith.constant 3 : index
    %247 = memref.load %arg7[%c7_92, %c3_93] : memref<8x8xf32, #tpu.memory_space<smem>>
    %248 = vector.broadcast %247 : f32 to vector<8x8xf32>
    %249 = arith.mulf %126, %248 : vector<8x8xf32>
    %250 = arith.addf %246, %249 : vector<8x8xf32>
    %c0_94 = arith.constant 0 : index
    %c4_95 = arith.constant 4 : index
    %251 = memref.load %arg7[%c0_94, %c4_95] : memref<8x8xf32, #tpu.memory_space<smem>>
    %252 = vector.broadcast %251 : f32 to vector<8x8xf32>
    %253 = arith.mulf %28, %252 : vector<8x8xf32>
    %c1_96 = arith.constant 1 : index
    %c4_97 = arith.constant 4 : index
    %254 = memref.load %arg7[%c1_96, %c4_97] : memref<8x8xf32, #tpu.memory_space<smem>>
    %255 = vector.broadcast %254 : f32 to vector<8x8xf32>
    %256 = arith.mulf %42, %255 : vector<8x8xf32>
    %257 = arith.addf %253, %256 : vector<8x8xf32>
    %c2_98 = arith.constant 2 : index
    %c4_99 = arith.constant 4 : index
    %258 = memref.load %arg7[%c2_98, %c4_99] : memref<8x8xf32, #tpu.memory_space<smem>>
    %259 = vector.broadcast %258 : f32 to vector<8x8xf32>
    %260 = arith.mulf %56, %259 : vector<8x8xf32>
    %261 = arith.addf %257, %260 : vector<8x8xf32>
    %c3_100 = arith.constant 3 : index
    %c4_101 = arith.constant 4 : index
    %262 = memref.load %arg7[%c3_100, %c4_101] : memref<8x8xf32, #tpu.memory_space<smem>>
    %263 = vector.broadcast %262 : f32 to vector<8x8xf32>
    %264 = arith.mulf %70, %263 : vector<8x8xf32>
    %265 = arith.addf %261, %264 : vector<8x8xf32>
    %c4_102 = arith.constant 4 : index
    %c4_103 = arith.constant 4 : index
    %266 = memref.load %arg7[%c4_102, %c4_103] : memref<8x8xf32, #tpu.memory_space<smem>>
    %267 = vector.broadcast %266 : f32 to vector<8x8xf32>
    %268 = arith.mulf %84, %267 : vector<8x8xf32>
    %269 = arith.addf %265, %268 : vector<8x8xf32>
    %c5_104 = arith.constant 5 : index
    %c4_105 = arith.constant 4 : index
    %270 = memref.load %arg7[%c5_104, %c4_105] : memref<8x8xf32, #tpu.memory_space<smem>>
    %271 = vector.broadcast %270 : f32 to vector<8x8xf32>
    %272 = arith.mulf %98, %271 : vector<8x8xf32>
    %273 = arith.addf %269, %272 : vector<8x8xf32>
    %c6_106 = arith.constant 6 : index
    %c4_107 = arith.constant 4 : index
    %274 = memref.load %arg7[%c6_106, %c4_107] : memref<8x8xf32, #tpu.memory_space<smem>>
    %275 = vector.broadcast %274 : f32 to vector<8x8xf32>
    %276 = arith.mulf %112, %275 : vector<8x8xf32>
    %277 = arith.addf %273, %276 : vector<8x8xf32>
    %c7_108 = arith.constant 7 : index
    %c4_109 = arith.constant 4 : index
    %278 = memref.load %arg7[%c7_108, %c4_109] : memref<8x8xf32, #tpu.memory_space<smem>>
    %279 = vector.broadcast %278 : f32 to vector<8x8xf32>
    %280 = arith.mulf %126, %279 : vector<8x8xf32>
    %281 = arith.addf %277, %280 : vector<8x8xf32>
    %c0_110 = arith.constant 0 : index
    %c5_111 = arith.constant 5 : index
    %282 = memref.load %arg7[%c0_110, %c5_111] : memref<8x8xf32, #tpu.memory_space<smem>>
    %283 = vector.broadcast %282 : f32 to vector<8x8xf32>
    %284 = arith.mulf %28, %283 : vector<8x8xf32>
    %c1_112 = arith.constant 1 : index
    %c5_113 = arith.constant 5 : index
    %285 = memref.load %arg7[%c1_112, %c5_113] : memref<8x8xf32, #tpu.memory_space<smem>>
    %286 = vector.broadcast %285 : f32 to vector<8x8xf32>
    %287 = arith.mulf %42, %286 : vector<8x8xf32>
    %288 = arith.addf %284, %287 : vector<8x8xf32>
    %c2_114 = arith.constant 2 : index
    %c5_115 = arith.constant 5 : index
    %289 = memref.load %arg7[%c2_114, %c5_115] : memref<8x8xf32, #tpu.memory_space<smem>>
    %290 = vector.broadcast %289 : f32 to vector<8x8xf32>
    %291 = arith.mulf %56, %290 : vector<8x8xf32>
    %292 = arith.addf %288, %291 : vector<8x8xf32>
    %c3_116 = arith.constant 3 : index
    %c5_117 = arith.constant 5 : index
    %293 = memref.load %arg7[%c3_116, %c5_117] : memref<8x8xf32, #tpu.memory_space<smem>>
    %294 = vector.broadcast %293 : f32 to vector<8x8xf32>
    %295 = arith.mulf %70, %294 : vector<8x8xf32>
    %296 = arith.addf %292, %295 : vector<8x8xf32>
    %c4_118 = arith.constant 4 : index
    %c5_119 = arith.constant 5 : index
    %297 = memref.load %arg7[%c4_118, %c5_119] : memref<8x8xf32, #tpu.memory_space<smem>>
    %298 = vector.broadcast %297 : f32 to vector<8x8xf32>
    %299 = arith.mulf %84, %298 : vector<8x8xf32>
    %300 = arith.addf %296, %299 : vector<8x8xf32>
    %c5_120 = arith.constant 5 : index
    %c5_121 = arith.constant 5 : index
    %301 = memref.load %arg7[%c5_120, %c5_121] : memref<8x8xf32, #tpu.memory_space<smem>>
    %302 = vector.broadcast %301 : f32 to vector<8x8xf32>
    %303 = arith.mulf %98, %302 : vector<8x8xf32>
    %304 = arith.addf %300, %303 : vector<8x8xf32>
    %c6_122 = arith.constant 6 : index
    %c5_123 = arith.constant 5 : index
    %305 = memref.load %arg7[%c6_122, %c5_123] : memref<8x8xf32, #tpu.memory_space<smem>>
    %306 = vector.broadcast %305 : f32 to vector<8x8xf32>
    %307 = arith.mulf %112, %306 : vector<8x8xf32>
    %308 = arith.addf %304, %307 : vector<8x8xf32>
    %c7_124 = arith.constant 7 : index
    %c5_125 = arith.constant 5 : index
    %309 = memref.load %arg7[%c7_124, %c5_125] : memref<8x8xf32, #tpu.memory_space<smem>>
    %310 = vector.broadcast %309 : f32 to vector<8x8xf32>
    %311 = arith.mulf %126, %310 : vector<8x8xf32>
    %312 = arith.addf %308, %311 : vector<8x8xf32>
    %c0_126 = arith.constant 0 : index
    %c6_127 = arith.constant 6 : index
    %313 = memref.load %arg7[%c0_126, %c6_127] : memref<8x8xf32, #tpu.memory_space<smem>>
    %314 = vector.broadcast %313 : f32 to vector<8x8xf32>
    %315 = arith.mulf %28, %314 : vector<8x8xf32>
    %c1_128 = arith.constant 1 : index
    %c6_129 = arith.constant 6 : index
    %316 = memref.load %arg7[%c1_128, %c6_129] : memref<8x8xf32, #tpu.memory_space<smem>>
    %317 = vector.broadcast %316 : f32 to vector<8x8xf32>
    %318 = arith.mulf %42, %317 : vector<8x8xf32>
    %319 = arith.addf %315, %318 : vector<8x8xf32>
    %c2_130 = arith.constant 2 : index
    %c6_131 = arith.constant 6 : index
    %320 = memref.load %arg7[%c2_130, %c6_131] : memref<8x8xf32, #tpu.memory_space<smem>>
    %321 = vector.broadcast %320 : f32 to vector<8x8xf32>
    %322 = arith.mulf %56, %321 : vector<8x8xf32>
    %323 = arith.addf %319, %322 : vector<8x8xf32>
    %c3_132 = arith.constant 3 : index
    %c6_133 = arith.constant 6 : index
    %324 = memref.load %arg7[%c3_132, %c6_133] : memref<8x8xf32, #tpu.memory_space<smem>>
    %325 = vector.broadcast %324 : f32 to vector<8x8xf32>
    %326 = arith.mulf %70, %325 : vector<8x8xf32>
    %327 = arith.addf %323, %326 : vector<8x8xf32>
    %c4_134 = arith.constant 4 : index
    %c6_135 = arith.constant 6 : index
    %328 = memref.load %arg7[%c4_134, %c6_135] : memref<8x8xf32, #tpu.memory_space<smem>>
    %329 = vector.broadcast %328 : f32 to vector<8x8xf32>
    %330 = arith.mulf %84, %329 : vector<8x8xf32>
    %331 = arith.addf %327, %330 : vector<8x8xf32>
    %c5_136 = arith.constant 5 : index
    %c6_137 = arith.constant 6 : index
    %332 = memref.load %arg7[%c5_136, %c6_137] : memref<8x8xf32, #tpu.memory_space<smem>>
    %333 = vector.broadcast %332 : f32 to vector<8x8xf32>
    %334 = arith.mulf %98, %333 : vector<8x8xf32>
    %335 = arith.addf %331, %334 : vector<8x8xf32>
    %c6_138 = arith.constant 6 : index
    %c6_139 = arith.constant 6 : index
    %336 = memref.load %arg7[%c6_138, %c6_139] : memref<8x8xf32, #tpu.memory_space<smem>>
    %337 = vector.broadcast %336 : f32 to vector<8x8xf32>
    %338 = arith.mulf %112, %337 : vector<8x8xf32>
    %339 = arith.addf %335, %338 : vector<8x8xf32>
    %c7_140 = arith.constant 7 : index
    %c6_141 = arith.constant 6 : index
    %340 = memref.load %arg7[%c7_140, %c6_141] : memref<8x8xf32, #tpu.memory_space<smem>>
    %341 = vector.broadcast %340 : f32 to vector<8x8xf32>
    %342 = arith.mulf %126, %341 : vector<8x8xf32>
    %343 = arith.addf %339, %342 : vector<8x8xf32>
    %c0_142 = arith.constant 0 : index
    %c7_143 = arith.constant 7 : index
    %344 = memref.load %arg7[%c0_142, %c7_143] : memref<8x8xf32, #tpu.memory_space<smem>>
    %345 = vector.broadcast %344 : f32 to vector<8x8xf32>
    %346 = arith.mulf %28, %345 : vector<8x8xf32>
    %c1_144 = arith.constant 1 : index
    %c7_145 = arith.constant 7 : index
    %347 = memref.load %arg7[%c1_144, %c7_145] : memref<8x8xf32, #tpu.memory_space<smem>>
    %348 = vector.broadcast %347 : f32 to vector<8x8xf32>
    %349 = arith.mulf %42, %348 : vector<8x8xf32>
    %350 = arith.addf %346, %349 : vector<8x8xf32>
    %c2_146 = arith.constant 2 : index
    %c7_147 = arith.constant 7 : index
    %351 = memref.load %arg7[%c2_146, %c7_147] : memref<8x8xf32, #tpu.memory_space<smem>>
    %352 = vector.broadcast %351 : f32 to vector<8x8xf32>
    %353 = arith.mulf %56, %352 : vector<8x8xf32>
    %354 = arith.addf %350, %353 : vector<8x8xf32>
    %c3_148 = arith.constant 3 : index
    %c7_149 = arith.constant 7 : index
    %355 = memref.load %arg7[%c3_148, %c7_149] : memref<8x8xf32, #tpu.memory_space<smem>>
    %356 = vector.broadcast %355 : f32 to vector<8x8xf32>
    %357 = arith.mulf %70, %356 : vector<8x8xf32>
    %358 = arith.addf %354, %357 : vector<8x8xf32>
    %c4_150 = arith.constant 4 : index
    %c7_151 = arith.constant 7 : index
    %359 = memref.load %arg7[%c4_150, %c7_151] : memref<8x8xf32, #tpu.memory_space<smem>>
    %360 = vector.broadcast %359 : f32 to vector<8x8xf32>
    %361 = arith.mulf %84, %360 : vector<8x8xf32>
    %362 = arith.addf %358, %361 : vector<8x8xf32>
    %c5_152 = arith.constant 5 : index
    %c7_153 = arith.constant 7 : index
    %363 = memref.load %arg7[%c5_152, %c7_153] : memref<8x8xf32, #tpu.memory_space<smem>>
    %364 = vector.broadcast %363 : f32 to vector<8x8xf32>
    %365 = arith.mulf %98, %364 : vector<8x8xf32>
    %366 = arith.addf %362, %365 : vector<8x8xf32>
    %c6_154 = arith.constant 6 : index
    %c7_155 = arith.constant 7 : index
    %367 = memref.load %arg7[%c6_154, %c7_155] : memref<8x8xf32, #tpu.memory_space<smem>>
    %368 = vector.broadcast %367 : f32 to vector<8x8xf32>
    %369 = arith.mulf %112, %368 : vector<8x8xf32>
    %370 = arith.addf %366, %369 : vector<8x8xf32>
    %c7_156 = arith.constant 7 : index
    %c7_157 = arith.constant 7 : index
    %371 = memref.load %arg7[%c7_156, %c7_157] : memref<8x8xf32, #tpu.memory_space<smem>>
    %372 = vector.broadcast %371 : f32 to vector<8x8xf32>
    %373 = arith.mulf %126, %372 : vector<8x8xf32>
    %374 = arith.addf %370, %373 : vector<8x8xf32>
    %375 = arith.addf %157, %188 : vector<8x8xf32>
    %376 = arith.addf %375, %219 : vector<8x8xf32>
    %377 = arith.addf %376, %250 : vector<8x8xf32>
    %378 = arith.addf %377, %281 : vector<8x8xf32>
    %379 = arith.addf %378, %312 : vector<8x8xf32>
    %380 = arith.addf %379, %343 : vector<8x8xf32>
    %381 = arith.addf %380, %374 : vector<8x8xf32>
    %cst_158 = arith.constant 1.250000e-01 : f32
    %382 = vector.broadcast %cst_158 : f32 to vector<8x8xf32>
    %383 = arith.mulf %381, %382 : vector<8x8xf32>
    %384 = arith.subf %157, %383 : vector<8x8xf32>
    %385 = arith.subf %157, %383 : vector<8x8xf32>
    %386 = arith.mulf %384, %385 : vector<8x8xf32>
    %387 = arith.subf %188, %383 : vector<8x8xf32>
    %388 = arith.mulf %387, %387 : vector<8x8xf32>
    %389 = arith.addf %386, %388 : vector<8x8xf32>
    %390 = arith.subf %219, %383 : vector<8x8xf32>
    %391 = arith.mulf %390, %390 : vector<8x8xf32>
    %392 = arith.addf %389, %391 : vector<8x8xf32>
    %393 = arith.subf %250, %383 : vector<8x8xf32>
    %394 = arith.mulf %393, %393 : vector<8x8xf32>
    %395 = arith.addf %392, %394 : vector<8x8xf32>
    %396 = arith.subf %281, %383 : vector<8x8xf32>
    %397 = arith.mulf %396, %396 : vector<8x8xf32>
    %398 = arith.addf %395, %397 : vector<8x8xf32>
    %399 = arith.subf %312, %383 : vector<8x8xf32>
    %400 = arith.mulf %399, %399 : vector<8x8xf32>
    %401 = arith.addf %398, %400 : vector<8x8xf32>
    %402 = arith.subf %343, %383 : vector<8x8xf32>
    %403 = arith.mulf %402, %402 : vector<8x8xf32>
    %404 = arith.addf %401, %403 : vector<8x8xf32>
    %405 = arith.subf %374, %383 : vector<8x8xf32>
    %406 = arith.mulf %405, %405 : vector<8x8xf32>
    %407 = arith.addf %404, %406 : vector<8x8xf32>
    %cst_159 = arith.constant 1.250000e-01 : f32
    %408 = vector.broadcast %cst_159 : f32 to vector<8x8xf32>
    %409 = arith.mulf %407, %408 : vector<8x8xf32>
    %cst_160 = arith.constant 9.99999974E-6 : f32
    %410 = vector.broadcast %cst_160 : f32 to vector<8x8xf32>
    %411 = arith.addf %409, %410 : vector<8x8xf32>
    %412 = math.rsqrt %411 : vector<8x8xf32>
    %413 = arith.subf %157, %383 : vector<8x8xf32>
    %414 = arith.mulf %413, %412 : vector<8x8xf32>
    %c0_161 = arith.constant 0 : index
    %415 = memref.load %arg8[%c0_161] : memref<8xf32, #tpu.memory_space<smem>>
    %416 = vector.broadcast %415 : f32 to vector<8x8xf32>
    %417 = arith.mulf %414, %416 : vector<8x8xf32>
    %c0_162 = arith.constant 0 : index
    %418 = memref.load %arg9[%c0_162] : memref<8xf32, #tpu.memory_space<smem>>
    %419 = vector.broadcast %418 : f32 to vector<8x8xf32>
    %420 = arith.addf %417, %419 : vector<8x8xf32>
    %421 = arith.truncf %420 : vector<8x8xf32> to vector<8x8xbf16>
    %cst_163 = arith.constant dense<0.000000e+00> : vector<8x16xf32>
    %422 = tpu.matmul %421, %17, %cst_163 {dimension_numbers = #tpu.dot_dimension_numbers<[1], [0], [0], [1], [0, 0, 1, 1], [], []>} : vector<8x8xbf16>, vector<8x16xbf16>, vector<8x16xf32> -> vector<8x16xf32>
    %423 = arith.subf %188, %383 : vector<8x8xf32>
    %424 = arith.mulf %423, %412 : vector<8x8xf32>
    %c1_164 = arith.constant 1 : index
    %425 = memref.load %arg8[%c1_164] : memref<8xf32, #tpu.memory_space<smem>>
    %426 = vector.broadcast %425 : f32 to vector<8x8xf32>
    %427 = arith.mulf %424, %426 : vector<8x8xf32>
    %c1_165 = arith.constant 1 : index
    %428 = memref.load %arg9[%c1_165] : memref<8xf32, #tpu.memory_space<smem>>
    %429 = vector.broadcast %428 : f32 to vector<8x8xf32>
    %430 = arith.addf %427, %429 : vector<8x8xf32>
    %431 = arith.truncf %430 : vector<8x8xf32> to vector<8x8xbf16>
    %cst_166 = arith.constant dense<0.000000e+00> : vector<8x16xf32>
    %432 = tpu.matmul %431, %31, %cst_166 {dimension_numbers = #tpu.dot_dimension_numbers<[1], [0], [0], [1], [0, 0, 1, 1], [], []>} : vector<8x8xbf16>, vector<8x16xbf16>, vector<8x16xf32> -> vector<8x16xf32>
    %433 = arith.subf %219, %383 : vector<8x8xf32>
    %434 = arith.mulf %433, %412 : vector<8x8xf32>
    %c2_167 = arith.constant 2 : index
    %435 = memref.load %arg8[%c2_167] : memref<8xf32, #tpu.memory_space<smem>>
    %436 = vector.broadcast %435 : f32 to vector<8x8xf32>
    %437 = arith.mulf %434, %436 : vector<8x8xf32>
    %c2_168 = arith.constant 2 : index
    %438 = memref.load %arg9[%c2_168] : memref<8xf32, #tpu.memory_space<smem>>
    %439 = vector.broadcast %438 : f32 to vector<8x8xf32>
    %440 = arith.addf %437, %439 : vector<8x8xf32>
    %441 = arith.truncf %440 : vector<8x8xf32> to vector<8x8xbf16>
    %cst_169 = arith.constant dense<0.000000e+00> : vector<8x16xf32>
    %442 = tpu.matmul %441, %45, %cst_169 {dimension_numbers = #tpu.dot_dimension_numbers<[1], [0], [0], [1], [0, 0, 1, 1], [], []>} : vector<8x8xbf16>, vector<8x16xbf16>, vector<8x16xf32> -> vector<8x16xf32>
    %443 = arith.subf %250, %383 : vector<8x8xf32>
    %444 = arith.mulf %443, %412 : vector<8x8xf32>
    %c3_170 = arith.constant 3 : index
    %445 = memref.load %arg8[%c3_170] : memref<8xf32, #tpu.memory_space<smem>>
    %446 = vector.broadcast %445 : f32 to vector<8x8xf32>
    %447 = arith.mulf %444, %446 : vector<8x8xf32>
    %c3_171 = arith.constant 3 : index
    %448 = memref.load %arg9[%c3_171] : memref<8xf32, #tpu.memory_space<smem>>
    %449 = vector.broadcast %448 : f32 to vector<8x8xf32>
    %450 = arith.addf %447, %449 : vector<8x8xf32>
    %451 = arith.truncf %450 : vector<8x8xf32> to vector<8x8xbf16>
    %cst_172 = arith.constant dense<0.000000e+00> : vector<8x16xf32>
    %452 = tpu.matmul %451, %59, %cst_172 {dimension_numbers = #tpu.dot_dimension_numbers<[1], [0], [0], [1], [0, 0, 1, 1], [], []>} : vector<8x8xbf16>, vector<8x16xbf16>, vector<8x16xf32> -> vector<8x16xf32>
    %453 = arith.subf %281, %383 : vector<8x8xf32>
    %454 = arith.mulf %453, %412 : vector<8x8xf32>
    %c4_173 = arith.constant 4 : index
    %455 = memref.load %arg8[%c4_173] : memref<8xf32, #tpu.memory_space<smem>>
    %456 = vector.broadcast %455 : f32 to vector<8x8xf32>
    %457 = arith.mulf %454, %456 : vector<8x8xf32>
    %c4_174 = arith.constant 4 : index
    %458 = memref.load %arg9[%c4_174] : memref<8xf32, #tpu.memory_space<smem>>
    %459 = vector.broadcast %458 : f32 to vector<8x8xf32>
    %460 = arith.addf %457, %459 : vector<8x8xf32>
    %461 = arith.truncf %460 : vector<8x8xf32> to vector<8x8xbf16>
    %cst_175 = arith.constant dense<0.000000e+00> : vector<8x16xf32>
    %462 = tpu.matmul %461, %73, %cst_175 {dimension_numbers = #tpu.dot_dimension_numbers<[1], [0], [0], [1], [0, 0, 1, 1], [], []>} : vector<8x8xbf16>, vector<8x16xbf16>, vector<8x16xf32> -> vector<8x16xf32>
    %463 = arith.subf %312, %383 : vector<8x8xf32>
    %464 = arith.mulf %463, %412 : vector<8x8xf32>
    %c5_176 = arith.constant 5 : index
    %465 = memref.load %arg8[%c5_176] : memref<8xf32, #tpu.memory_space<smem>>
    %466 = vector.broadcast %465 : f32 to vector<8x8xf32>
    %467 = arith.mulf %464, %466 : vector<8x8xf32>
    %c5_177 = arith.constant 5 : index
    %468 = memref.load %arg9[%c5_177] : memref<8xf32, #tpu.memory_space<smem>>
    %469 = vector.broadcast %468 : f32 to vector<8x8xf32>
    %470 = arith.addf %467, %469 : vector<8x8xf32>
    %471 = arith.truncf %470 : vector<8x8xf32> to vector<8x8xbf16>
    %cst_178 = arith.constant dense<0.000000e+00> : vector<8x16xf32>
    %472 = tpu.matmul %471, %87, %cst_178 {dimension_numbers = #tpu.dot_dimension_numbers<[1], [0], [0], [1], [0, 0, 1, 1], [], []>} : vector<8x8xbf16>, vector<8x16xbf16>, vector<8x16xf32> -> vector<8x16xf32>
    %473 = arith.subf %343, %383 : vector<8x8xf32>
    %474 = arith.mulf %473, %412 : vector<8x8xf32>
    %c6_179 = arith.constant 6 : index
    %475 = memref.load %arg8[%c6_179] : memref<8xf32, #tpu.memory_space<smem>>
    %476 = vector.broadcast %475 : f32 to vector<8x8xf32>
    %477 = arith.mulf %474, %476 : vector<8x8xf32>
    %c6_180 = arith.constant 6 : index
    %478 = memref.load %arg9[%c6_180] : memref<8xf32, #tpu.memory_space<smem>>
    %479 = vector.broadcast %478 : f32 to vector<8x8xf32>
    %480 = arith.addf %477, %479 : vector<8x8xf32>
    %481 = arith.truncf %480 : vector<8x8xf32> to vector<8x8xbf16>
    %cst_181 = arith.constant dense<0.000000e+00> : vector<8x16xf32>
    %482 = tpu.matmul %481, %101, %cst_181 {dimension_numbers = #tpu.dot_dimension_numbers<[1], [0], [0], [1], [0, 0, 1, 1], [], []>} : vector<8x8xbf16>, vector<8x16xbf16>, vector<8x16xf32> -> vector<8x16xf32>
    %483 = arith.subf %374, %383 : vector<8x8xf32>
    %484 = arith.mulf %483, %412 : vector<8x8xf32>
    %c7_182 = arith.constant 7 : index
    %485 = memref.load %arg8[%c7_182] : memref<8xf32, #tpu.memory_space<smem>>
    %486 = vector.broadcast %485 : f32 to vector<8x8xf32>
    %487 = arith.mulf %484, %486 : vector<8x8xf32>
    %c7_183 = arith.constant 7 : index
    %488 = memref.load %arg9[%c7_183] : memref<8xf32, #tpu.memory_space<smem>>
    %489 = vector.broadcast %488 : f32 to vector<8x8xf32>
    %490 = arith.addf %487, %489 : vector<8x8xf32>
    %491 = arith.truncf %490 : vector<8x8xf32> to vector<8x8xbf16>
    %cst_184 = arith.constant dense<0.000000e+00> : vector<8x16xf32>
    %492 = tpu.matmul %491, %115, %cst_184 {dimension_numbers = #tpu.dot_dimension_numbers<[1], [0], [0], [1], [0, 0, 1, 1], [], []>} : vector<8x8xbf16>, vector<8x16xbf16>, vector<8x16xf32> -> vector<8x16xf32>
    %493 = tpu.concatenate %422, %432, %442, %452, %462, %472, %482, %492 in 1 : vector<8x16xf32>, vector<8x16xf32>, vector<8x16xf32>, vector<8x16xf32>, vector<8x16xf32>, vector<8x16xf32>, vector<8x16xf32>, vector<8x16xf32> -> vector<8x128xf32>
    %494 = arith.truncf %493 : vector<8x128xf32> to vector<8x128xbf16>
    %c0_185 = arith.constant 0 : index
    %c0_186 = arith.constant 0 : index
    %495 = vector.load %arg10[%c0_185, %c0_186] : memref<128x32xbf16, #tpu.memory_space<vmem>>, vector<128x32xbf16>
    %cst_187 = arith.constant dense<0.000000e+00> : vector<8x32xf32>
    %496 = tpu.matmul %494, %495, %cst_187 {dimension_numbers = #tpu.dot_dimension_numbers<[1], [0], [0], [1], [0, 0, 1, 1], [], []>} : vector<8x128xbf16>, vector<128x32xbf16>, vector<8x32xf32> -> vector<8x32xf32>
    %c0_188 = arith.constant 0 : index
    %c0_189 = arith.constant 0 : index
    %497 = vector.load %arg11[%c0_188, %c0_189] : memref<1x32xf32, #tpu.memory_space<vmem>>, vector<1x32xf32>
    %498 = vector.broadcast %497 : vector<1x32xf32> to vector<8x32xf32>
    %499 = arith.addf %496, %498 : vector<8x32xf32>
    %c0_190 = arith.constant 0 : index
    %c0_191 = arith.constant 0 : index
    %c0_192 = arith.constant 0 : index
    %500 = vector.load %arg12[%c0_190, %c0_191, %c0_192] : memref<1x8x32xf32, #tpu.memory_space<vmem>>, vector<1x8x32xf32>
    %501 = vector.shape_cast %500 : vector<1x8x32xf32> to vector<8x32xf32>
    %502 = vector.shape_cast %499 : vector<8x32xf32> to vector<1x8x32xf32>
    tpu.vector_store %arg12[%c0_190, %c0_191, %c0_192], %502 {strides = array<i32>} : memref<1x8x32xf32, #tpu.memory_space<vmem>>, vector<1x8x32xf32>,
    return
  }
  func.func @transform_0(%arg0: i32, %arg1: i32) -> (i32, i32, i32) {
    %c0_i32 = arith.constant 0 : i32
    %c0_i32_0 = arith.constant 0 : i32
    return %arg0, %arg1, %c0_i32 : i32, i32, i32
  }
  func.func @transform_1(%arg0: i32, %arg1: i32) -> (i32, i32, i32) {
    %c0_i32 = arith.constant 0 : i32
    %c0_i32_0 = arith.constant 0 : i32
    %c0_i32_1 = arith.constant 0 : i32
    return %arg0, %c0_i32, %c0_i32_0 : i32, i32, i32
  }
  func.func @transform_2(%arg0: i32, %arg1: i32) -> (i32, i32) {
    %c0_i32 = arith.constant 0 : i32
    %c0_i32_0 = arith.constant 0 : i32
    %c0_i32_1 = arith.constant 0 : i32
    return %c0_i32, %c0_i32_0 : i32, i32
  }
  func.func @transform_3(%arg0: i32, %arg1: i32) -> (i32, i32) {
    %c0_i32 = arith.constant 0 : i32
    %c0_i32_0 = arith.constant 0 : i32
    %c0_i32_1 = arith.constant 0 : i32
    return %c0_i32, %c0_i32_0 : i32, i32
  }
  func.func @transform_4(%arg0: i32, %arg1: i32) -> (i32, i32) {
    %c0_i32 = arith.constant 0 : i32
    %c0_i32_0 = arith.constant 0 : i32
    %c0_i32_1 = arith.constant 0 : i32
    return %c0_i32, %c0_i32_0 : i32, i32
  }
  func.func @transform_5(%arg0: i32, %arg1: i32) -> (i32, i32) {
    %c0_i32 = arith.constant 0 : i32
    %c0_i32_0 = arith.constant 0 : i32
    %c0_i32_1 = arith.constant 0 : i32
    return %c0_i32, %c0_i32_0 : i32, i32
  }
  func.func @transform_6(%arg0: i32, %arg1: i32) -> i32 {
    %c0_i32 = arith.constant 0 : i32
    %c0_i32_0 = arith.constant 0 : i32
    return %c0_i32 : i32
  }
  func.func @transform_7(%arg0: i32, %arg1: i32) -> i32 {
    %c0_i32 = arith.constant 0 : i32
    %c0_i32_0 = arith.constant 0 : i32
    return %c0_i32 : i32
  }
  func.func @transform_8(%arg0: i32, %arg1: i32) -> (i32, i32) {
    %c0_i32 = arith.constant 0 : i32
    %c0_i32_0 = arith.constant 0 : i32
    %c0_i32_1 = arith.constant 0 : i32
    return %c0_i32, %c0_i32_0 : i32, i32
  }
  func.func @transform_9(%arg0: i32, %arg1: i32) -> (i32, i32) {
    %c0_i32 = arith.constant 0 : i32
    %c0_i32_0 = arith.constant 0 : i32
    %c0_i32_1 = arith.constant 0 : i32
    return %c0_i32, %c0_i32_0 : i32, i32
  }
  func.func @transform_10(%arg0: i32, %arg1: i32) -> (i32, i32, i32) {
    %c0_i32 = arith.constant 0 : i32
    %c0_i32_0 = arith.constant 0 : i32
    return %arg0, %arg1, %c0_i32 : i32, i32, i32
  }
}

</mosaic_0001>

<llo_original>
// kernel: tpu_custom_call.1
$region0: #{tpu_custom_call.1}
  #allocation0 [shape = 'u32[]', space=smem, size = 0x4, offset = 0x4, fixed_abs, tag = 'smem constant byte address 0x4 - core index']
  #allocation1 [shape = 'u32[72,128]{1,0:T(1,128)}', space=vmem, size = 0x9000, scoped, tag = 'internal scratch']
  %s0 = inlined_call_operand.vmem [shape: f32[2,8,32], index: 0, kind: input, shape index: {}]
  %s1 = inlined_call_operand.vmem [shape: f32[2,8,32], index: 1, kind: input, shape index: {}]
  %s2 = inlined_call_operand.vmem [shape: bf16[32,128], index: 2, kind: input, shape index: {}]
  %s3 = inlined_call_operand.vmem [shape: bf16[32,128], index: 3, kind: input, shape index: {}]
  %s4 = inlined_call_operand.vmem [shape: bf16[32,128], index: 4, kind: input, shape index: {}]
  %s5 = inlined_call_operand.hbm [shape: f32[8,8], index: 5, kind: input, shape index: {}]
  %s6 = inlined_call_operand.vmem [shape: f32[8], index: 6, kind: input, shape index: {}]
  %s7 = inlined_call_operand.vmem [shape: f32[8], index: 7, kind: input, shape index: {}]
  %s8 = inlined_call_operand.vmem [shape: bf16[128,32], index: 8, kind: input, shape index: {}]
  %s9 = inlined_call_operand.vmem [shape: f32[1,32], index: 9, kind: input, shape index: {}]
  %s10 = inlined_call_operand.hbm [shape: f32[2,8,32], index: 10, kind: output, shape index: {}]
  %s11 = sld [smem:[#allocation0]]
  $region85: #{tpu_custom_call.1} parent=0
    _
  %s13 = ssub.s32 1, %s11
  %s14 = scalar_select 0, %s13, %s11
  $region1: #{tpu_custom_call.1} parent=0
    #allocation2 [shape = 'u8[4096]{0}', space=smem, size = 0x1000, scoped, tag = 'input window, operand 5, single buffered']
    #allocation3 [shape = 's32[2]{0}', space=sflag, size = 0x8, scoped, tag = 'scoped memory for tpu_custom_call.1']
    #allocation4 [shape = 's32[2]{0}', space=sflag, size = 0x8, scoped, tag = 'scoped memory for tpu_custom_call.1']
    #allocation5 [shape = 's32[2]{0}', space=sflag, size = 0x8, scoped, tag = 'scoped memory for tpu_custom_call.1']
    #allocation6 [shape = 'u8[512]{0}', space=smem, size = 0x200, scoped, tag = 'input window, operand 6, single buffered']
    #allocation7 [shape = 'u8[512]{0}', space=smem, size = 0x200, scoped, tag = 'input window, operand 7, single buffered']
    #allocation8 [shape = 's32[1]{0}', space=sflag, size = 0x4, scoped, tag = 'scoped memory for tpu_custom_call.1']
    #allocation9 [shape = 'u8[8192]{0}', space=vmem, size = 0x2000, scoped, tag = 'output window, operand 0']
    %15 = vsyncpa [#allocation4], 0
    %16 = vsyncpa [#allocation5], 0
    %17 = vsyncpa [#allocation8], 0
    %18 = vsyncpa [#allocation3], 0
    %s19 = scalar_lea.sflag [#allocation3], 1
    %20 = vsyncpa %s19, 0
    loop: start=0, step=1, limit=4
    $region2: #{tpu_custom_call.1} parent=1 // loop_pre_header
      _
    $region3: #{tpu_custom_call.1} parent=1 // loop_header
      %s22 = sphi 0, %s26
      %p23 = scmp.ge.s32.totalorder %s22, 4
      %s29 = sphi 0, %s41
      %s30 = sphi 0, %s37
      %s31 = sphi 0, %s29
      %s32 = sphi 0, %s30
      %s33 = sphi 0, %s31
      %s34 = sphi 0, %s32
      %s46 = sphi 0, %s48
      %s49 = sphi 0, %s46
      %s50 = sphi 0, %s49
      %s66 = sphi 0, %s50
      %s72 = sphi 0, %s74
      %s75 = sphi 0, %s72
      %s76 = sphi 0, %s75
      %s92 = sphi 0, %s76
      %s96 = sphi 0, %s96
      %s98 = sphi 0, %s96
      %s99 = sphi 0, %s98
      %s113 = sphi 0, %s99
      %s117 = sphi 0, %s117
      %s119 = sphi 0, %s117
      %s120 = sphi 0, %s119
      %s134 = sphi 0, %s120
      %s138 = sphi 0, %s138
      %s140 = sphi 0, %s138
      %s141 = sphi 0, %s140
      %s155 = sphi 0, %s141
      %s159 = sphi 0, %s159
      %s161 = sphi 0, %s159
      %s162 = sphi 0, %s161
      %s176 = sphi 0, %s162
      %s180 = sphi 0, %s180
      %s182 = sphi 0, %s180
      %s183 = sphi 0, %s182
      %s197 = sphi 0, %s183
      %s201 = sphi 0, %s201
      %s203 = sphi 0, %s201
      %s204 = sphi 0, %s203
      %s218 = sphi 0, %s204
      %s222 = sphi 0, %s222
      %s224 = sphi 0, %s222
      %s225 = sphi 0, %s224
      %s239 = sphi 0, %s225
      %s243 = sphi 0, %s243
      %s245 = sphi 0, %s243
      %s246 = sphi 0, %s245
      %s260 = sphi 0, %s246
      %s268 = sphi 0, %s270
      %s271 = sphi 0, %s268
      %s272 = sphi 0, %s271
      %s288 = sphi 0, %s272
    $region4: #{tpu_custom_call.1} parent=1 // loop_header_branch
      %25 = sbr.rel (%p23) target = $region8
    $region5: #{tpu_custom_call.1} parent=1 // loop_body
      %s27 = ssub.s32 %s22, 1
      %s28 = ssub.s32 %s22, 2
      %s35 = sadd.s32 1, %s30
      %p36 = scmp.ge.s32.totalorder %s35, 1
      %s37 = scalar_select %p36, 0, %s35
      %s38 = sadd.s32 1, %s29
      %s39 = scalar_select %p36, %s38, %s29
      %p40 = scmp.ge.s32.totalorder %s39, 2
      %s41 = scalar_select %p40, 0, %s39
      %s42 = ssub.s32 %s29, %s41
      %s43 = ssub.s32 %s30, %s37
      %s44 = sor.u32 %s42, %s43
      %p45 = scmp.eq.s32.totalorder %s44, 0
      %s47 = sadd.s32 %s46, 1
      %s48 = scalar_select %p45, %s46, %s47
      %p51 = pneg %p45
      %p52 = scmp.eq.s32.totalorder %s22, 1
      %p53 = por %p51, %p52
      %p54 = scmp.ne.s32.totalorder %s46, %s49
      %p55 = scmp.eq.s32.totalorder %s22, 0
      %p56 = por %p54, %p55
      %p57 = scmp.ne.s32.totalorder %s46, %s49
      %p58 = scmp.eq.s32.totalorder %s27, 1
      %p59 = por %p57, %p58
      %p60 = scmp.ne.s32.totalorder %s49, %s50
      %p61 = scmp.eq.s32.totalorder %s27, 0
      %p62 = por %p60, %p61
      %p63 = scmp.ne.s32.totalorder %s49, %s50
      %p64 = scmp.eq.s32.totalorder %s28, 1
      %p65 = por %p63, %p64
      %p67 = scmp.ne.s32.totalorder %s50, %s66
      %p68 = scmp.eq.s32.totalorder %s28, 0
      %p69 = por %p67, %p68
      %s70 = ssub.s32 %s29, %s41
      %p71 = scmp.eq.s32.totalorder %s70, 0
      %s73 = sadd.s32 %s72, 1
      %s74 = scalar_select %p71, %s72, %s73
      %p77 = pneg %p71
      %p78 = scmp.eq.s32.totalorder %s22, 1
      %p79 = por %p77, %p78
      %p80 = scmp.ne.s32.totalorder %s72, %s75
      %p81 = scmp.eq.s32.totalorder %s22, 0
      %p82 = por %p80, %p81
      %p83 = scmp.ne.s32.totalorder %s72, %s75
      %p84 = scmp.eq.s32.totalorder %s27, 1
      %p85 = por %p83, %p84
      %p86 = scmp.ne.s32.totalorder %s75, %s76
      %p87 = scmp.eq.s32.totalorder %s27, 0
      %p88 = por %p86, %p87
      %p89 = scmp.ne.s32.totalorder %s75, %s76
      %p90 = scmp.eq.s32.totalorder %s28, 1
      %p91 = por %p89, %p90
      %p93 = scmp.ne.s32.totalorder %s76, %s92
      %p94 = scmp.eq.s32.totalorder %s28, 0
      %p95 = por %p93, %p94
      %s97 = sadd.s32 %s96, 1
      %p100 = scmp.eq.s32.totalorder %s22, 1
      %p101 = scmp.ne.s32.totalorder %s96, %s98
      %p102 = scmp.eq.s32.totalorder %s22, 0
      %p103 = por %p101, %p102
      %p104 = scmp.ne.s32.totalorder %s96, %s98
      %p105 = scmp.eq.s32.totalorder %s27, 1
      %p106 = por %p104, %p105
      %p107 = scmp.ne.s32.totalorder %s98, %s99
      %p108 = scmp.eq.s32.totalorder %s27, 0
      %p109 = por %p107, %p108
      %p110 = scmp.ne.s32.totalorder %s98, %s99
      %p111 = scmp.eq.s32.totalorder %s28, 1
      %p112 = por %p110, %p111
      %p114 = scmp.ne.s32.totalorder %s99, %s113
      %p115 = scmp.eq.s32.totalorder %s28, 0
      %p116 = por %p114, %p115
      %s118 = sadd.s32 %s117, 1
      %p121 = scmp.eq.s32.totalorder %s22, 1
      %p122 = scmp.ne.s32.totalorder %s117, %s119
      %p123 = scmp.eq.s32.totalorder %s22, 0
      %p124 = por %p122, %p123
      %p125 = scmp.ne.s32.totalorder %s117, %s119
      %p126 = scmp.eq.s32.totalorder %s27, 1
      %p127 = por %p125, %p126
      %p128 = scmp.ne.s32.totalorder %s119, %s120
      %p129 = scmp.eq.s32.totalorder %s27, 0
      %p130 = por %p128, %p129
      %p131 = scmp.ne.s32.totalorder %s119, %s120
      %p132 = scmp.eq.s32.totalorder %s28, 1
      %p133 = por %p131, %p132
      %p135 = scmp.ne.s32.totalorder %s120, %s134
      %p136 = scmp.eq.s32.totalorder %s28, 0
      %p137 = por %p135, %p136
      %s139 = sadd.s32 %s138, 1
      %p142 = scmp.eq.s32.totalorder %s22, 1
      %p143 = scmp.ne.s32.totalorder %s138, %s140
      %p144 = scmp.eq.s32.totalorder %s22, 0
      %p145 = por %p143, %p144
      %p146 = scmp.ne.s32.totalorder %s138, %s140
      %p147 = scmp.eq.s32.totalorder %s27, 1
      %p148 = por %p146, %p147
      %p149 = scmp.ne.s32.totalorder %s140, %s141
      %p150 = scmp.eq.s32.totalorder %s27, 0
      %p151 = por %p149, %p150
      %p152 = scmp.ne.s32.totalorder %s140, %s141
      %p153 = scmp.eq.s32.totalorder %s28, 1
      %p154 = por %p152, %p153
      %p156 = scmp.ne.s32.totalorder %s141, %s155
      %p157 = scmp.eq.s32.totalorder %s28, 0
      %p158 = por %p156, %p157
      %s160 = sadd.s32 %s159, 1
      %p163 = scmp.eq.s32.totalorder %s22, 1
      %p164 = scmp.ne.s32.totalorder %s159, %s161
      %p165 = scmp.eq.s32.totalorder %s22, 0
      %p166 = por %p164, %p165
      %p167 = scmp.ne.s32.totalorder %s159, %s161
      %p168 = scmp.eq.s32.totalorder %s27, 1
      %p169 = por %p167, %p168
      %p170 = scmp.ne.s32.totalorder %s161, %s162
      %p171 = scmp.eq.s32.totalorder %s27, 0
      %p172 = por %p170, %p171
      %p173 = scmp.ne.s32.totalorder %s161, %s162
      %p174 = scmp.eq.s32.totalorder %s28, 1
      %p175 = por %p173, %p174
      %p177 = scmp.ne.s32.totalorder %s162, %s176
      %p178 = scmp.eq.s32.totalorder %s28, 0
      %p179 = por %p177, %p178
      %s181 = sadd.s32 %s180, 1
      %p184 = scmp.eq.s32.totalorder %s22, 1
      %p185 = scmp.ne.s32.totalorder %s180, %s182
      %p186 = scmp.eq.s32.totalorder %s22, 0
      %p187 = por %p185, %p186
      %p188 = scmp.ne.s32.totalorder %s180, %s182
      %p189 = scmp.eq.s32.totalorder %s27, 1
      %p190 = por %p188, %p189
      %p191 = scmp.ne.s32.totalorder %s182, %s183
      %p192 = scmp.eq.s32.totalorder %s27, 0
      %p193 = por %p191, %p192
      %p194 = scmp.ne.s32.totalorder %s182, %s183
      %p195 = scmp.eq.s32.totalorder %s28, 1
      %p196 = por %p194, %p195
      %p198 = scmp.ne.s32.totalorder %s183, %s197
      %p199 = scmp.eq.s32.totalorder %s28, 0
      %p200 = por %p198, %p199
      %s202 = sadd.s32 %s201, 1
      %p205 = scmp.eq.s32.totalorder %s22, 1
      %p206 = scmp.ne.s32.totalorder %s201, %s203
      %p207 = scmp.eq.s32.totalorder %s22, 0
      %p208 = por %p206, %p207
      %p209 = scmp.ne.s32.totalorder %s201, %s203
      %p210 = scmp.eq.s32.totalorder %s27, 1
      %p211 = por %p209, %p210
      %p212 = scmp.ne.s32.totalorder %s203, %s204
      %p213 = scmp.eq.s32.totalorder %s27, 0
      %p214 = por %p212, %p213
      %p215 = scmp.ne.s32.totalorder %s203, %s204
      %p216 = scmp.eq.s32.totalorder %s28, 1
      %p217 = por %p215, %p216
      %p219 = scmp.ne.s32.totalorder %s204, %s218
      %p220 = scmp.eq.s32.totalorder %s28, 0
      %p221 = por %p219, %p220
      %s223 = sadd.s32 %s222, 1
      %p226 = scmp.eq.s32.totalorder %s22, 1
      %p227 = scmp.ne.s32.totalorder %s222, %s224
      %p228 = scmp.eq.s32.totalorder %s22, 0
      %p229 = por %p227, %p228
      %p230 = scmp.ne.s32.totalorder %s222, %s224
      %p231 = scmp.eq.s32.totalorder %s27, 1
      %p232 = por %p230, %p231
      %p233 = scmp.ne.s32.totalorder %s224, %s225
      %p234 = scmp.eq.s32.totalorder %s27, 0
      %p235 = por %p233, %p234
      %p236 = scmp.ne.s32.totalorder %s224, %s225
      %p237 = scmp.eq.s32.totalorder %s28, 1
      %p238 = por %p236, %p237
      %p240 = scmp.ne.s32.totalorder %s225, %s239
      %p241 = scmp.eq.s32.totalorder %s28, 0
      %p242 = por %p240, %p241
      %s244 = sadd.s32 %s243, 1
      %p247 = scmp.eq.s32.totalorder %s22, 1
      %p248 = scmp.ne.s32.totalorder %s243, %s245
      %p249 = scmp.eq.s32.totalorder %s22, 0
      %p250 = por %p248, %p249
      %p251 = scmp.ne.s32.totalorder %s243, %s245
      %p252 = scmp.eq.s32.totalorder %s27, 1
      %p253 = por %p251, %p252
      %p254 = scmp.ne.s32.totalorder %s245, %s246
      %p255 = scmp.eq.s32.totalorder %s27, 0
      %p256 = por %p254, %p255
      %p257 = scmp.ne.s32.totalorder %s245, %s246
      %p258 = scmp.eq.s32.totalorder %s28, 1
      %p259 = por %p257, %p258
      %p261 = scmp.ne.s32.totalorder %s246, %s260
      %p262 = scmp.eq.s32.totalorder %s28, 0
      %p263 = por %p261, %p262
      %s264 = ssub.s32 %s29, %s41
      %s265 = ssub.s32 %s30, %s37
      %s266 = sor.u32 %s264, %s265
      %p267 = scmp.eq.s32.totalorder %s266, 0
      %s269 = sadd.s32 %s268, 1
      %s270 = scalar_select %p267, %s268, %s269
      %p273 = pneg %p267
      %p274 = scmp.eq.s32.totalorder %s22, 1
      %p275 = por %p273, %p274
      %p276 = scmp.ne.s32.totalorder %s268, %s271
      %p277 = scmp.eq.s32.totalorder %s22, 0
      %p278 = por %p276, %p277
      %p279 = scmp.ne.s32.totalorder %s268, %s271
      %p280 = scmp.eq.s32.totalorder %s27, 1
      %p281 = por %p279, %p280
      %p282 = scmp.ne.s32.totalorder %s271, %s272
      %p283 = scmp.eq.s32.totalorder %s27, 0
      %p284 = por %p282, %p283
      %p285 = scmp.ne.s32.totalorder %s271, %s272
      %p286 = scmp.eq.s32.totalorder %s28, 1
      %p287 = por %p285, %p286
      %p289 = scmp.ne.s32.totalorder %s272, %s288
      %p290 = scmp.eq.s32.totalorder %s28, 0
      %p291 = por %p289, %p290
      %p292 = scmp.le.s32.totalorder 1, %s22
      %p293 = scmp.lt.s32.totalorder %s22, 3
      %p294 = pnand %p292, %p293
      %p295 = pneg %p294
      // Predicated region
      $region9: #{tpu_custom_call.1} parent=5 // pred_check
        _
      $region10: #{tpu_custom_call.1} parent=5 // pred_check_branch
        %297 = sbr.rel (%p294) target = $region12
      $region11: #{tpu_custom_call.1} parent=5 // pred_region
        %s298 = ssub.s32 %s22, 1
        // Predicated region
        $region13: #{tpu_custom_call.1} parent=11 // pred_check
          %p299 = pneg %p109
        $region14: #{tpu_custom_call.1} parent=11 // pred_check_branch
          %301 = sbr.rel (%p299) target = $region16
        $region15: #{tpu_custom_call.1} parent=11 // pred_region
          _
        $region16: #{tpu_custom_call.1} parent=11 // pred_fallthru
          _
        // Predicated region
        $region17: #{tpu_custom_call.1} parent=11 // pred_check
          %p302 = pneg %p130
        $region18: #{tpu_custom_call.1} parent=11 // pred_check_branch
          %304 = sbr.rel (%p302) target = $region20
        $region19: #{tpu_custom_call.1} parent=11 // pred_region
          _
        $region20: #{tpu_custom_call.1} parent=11 // pred_fallthru
          _
        // Predicated region
        $region21: #{tpu_custom_call.1} parent=11 // pred_check
          %p305 = pneg %p151
        $region22: #{tpu_custom_call.1} parent=11 // pred_check_branch
          %307 = sbr.rel (%p305) target = $region24
        $region23: #{tpu_custom_call.1} parent=11 // pred_region
          _
        $region24: #{tpu_custom_call.1} parent=11 // pred_fallthru
          _
        // Predicated region
        $region25: #{tpu_custom_call.1} parent=11 // pred_check
          %p308 = pneg %p172
        $region26: #{tpu_custom_call.1} parent=11 // pred_check_branch
          %310 = sbr.rel (%p308) target = $region28
        $region27: #{tpu_custom_call.1} parent=11 // pred_region
          %312 = vsyncadd [#allocation4], 0
          %s314 = sshll.u32 %s5, 4
          %s315 = int_to_ptr.hbm [resolvable:$true] %s314
          %317 = dma.hbm_to_smem %s315, 128, [#allocation2], [#allocation4]
        $region28: #{tpu_custom_call.1} parent=11 // pred_fallthru
          _
        // Predicated region
        $region29: #{tpu_custom_call.1} parent=11 // pred_check
          %p318 = pneg %p193
        $region30: #{tpu_custom_call.1} parent=11 // pred_check_branch
          %320 = sbr.rel (%p318) target = $region32
        $region31: #{tpu_custom_call.1} parent=11 // pred_region
          %322 = vsyncadd [#allocation5], 0
          %s324 = sshll.u32 %s6, 4
          %s325 = int_to_ptr.vmem [resolvable:$true] %s324
          %327 = dma.vmem_to_smem %s325, 16, [#allocation6], [#allocation5]
        $region32: #{tpu_custom_call.1} parent=11 // pred_fallthru
          _
        // Predicated region
        $region33: #{tpu_custom_call.1} parent=11 // pred_check
          %p328 = pneg %p214
        $region34: #{tpu_custom_call.1} parent=11 // pred_check_branch
          %330 = sbr.rel (%p328) target = $region36
        $region35: #{tpu_custom_call.1} parent=11 // pred_region
          %332 = vsyncadd [#allocation8], 0
          %s334 = sshll.u32 %s7, 4
          %s335 = int_to_ptr.vmem [resolvable:$true] %s334
          %337 = dma.vmem_to_smem %s335, 16, [#allocation7], [#allocation8]
        $region36: #{tpu_custom_call.1} parent=11 // pred_fallthru
          _
        // Predicated region
        $region37: #{tpu_custom_call.1} parent=11 // pred_check
          %p338 = pneg %p235
        $region38: #{tpu_custom_call.1} parent=11 // pred_check_branch
          %340 = sbr.rel (%p338) target = $region40
        $region39: #{tpu_custom_call.1} parent=11 // pred_region
          _
        $region40: #{tpu_custom_call.1} parent=11 // pred_fallthru
          _
        // Predicated region
        $region41: #{tpu_custom_call.1} parent=11 // pred_check
          %p341 = pneg %p256
        $region42: #{tpu_custom_call.1} parent=11 // pred_check_branch
          %343 = sbr.rel (%p341) target = $region44
        $region43: #{tpu_custom_call.1} parent=11 // pred_region
          _
        $region44: #{tpu_custom_call.1} parent=11 // pred_fallthru
          _
      $region12: #{tpu_custom_call.1} parent=5 // pred_fallthru
        _
      %p344 = scmp.lt.s32.totalorder %s22, 2
      // Predicated region
      $region45: #{tpu_custom_call.1} parent=5 // pred_check
        %p345 = pneg %p344
      $region46: #{tpu_custom_call.1} parent=5 // pred_check_branch
        %347 = sbr.rel (%p345) target = $region48
      $region47: #{tpu_custom_call.1} parent=5 // pred_region
        // Predicated region
        $region49: #{tpu_custom_call.1} parent=47 // pred_check
          %p348 = pneg %p56
        $region50: #{tpu_custom_call.1} parent=47 // pred_check_branch
          %350 = sbr.rel (%p348) target = $region52
        $region51: #{tpu_custom_call.1} parent=47 // pred_region
          %p351 = scmp.lt.s32.totalorder %s29, 1
          %s352 = scalar_select %p351, %s29, 1
          %p353 = scmp.lt.s32.totalorder %s30, 0
          %s354 = scalar_select %p353, %s30, 0
          %s355 = sadd.s32 %s354, %s352
          %s356 = smul.addr %s355, 8
          %s357 = scalar_lea.vmem %s0, %s356
        $region52: #{tpu_custom_call.1} parent=47 // pred_fallthru
          _
        // Predicated region
        $region53: #{tpu_custom_call.1} parent=47 // pred_check
          %p358 = pneg %p82
        $region54: #{tpu_custom_call.1} parent=47 // pred_check_branch
          %360 = sbr.rel (%p358) target = $region56
        $region55: #{tpu_custom_call.1} parent=47 // pred_region
          %p361 = scmp.lt.s32.totalorder %s29, 1
          %s362 = scalar_select %p361, %s29, 1
          %s363 = smul.addr %s362, 8
          %s364 = scalar_lea.vmem %s1, %s363
        $region56: #{tpu_custom_call.1} parent=47 // pred_fallthru
          _
      $region48: #{tpu_custom_call.1} parent=5 // pred_fallthru
        _
      %p365 = scmp.le.s32.totalorder 1, %s22
      %p366 = scmp.lt.s32.totalorder %s22, 3
      %p367 = pnand %p365, %p366
      %p368 = pneg %p367
      // Predicated region
      $region57: #{tpu_custom_call.1} parent=5 // pred_check
        _
      $region58: #{tpu_custom_call.1} parent=5 // pred_check_branch
        %370 = sbr.rel (%p367) target = $region60
      $region59: #{tpu_custom_call.1} parent=5 // pred_region
        %s371 = ssub.s32 %s22, 1
        // Predicated region
        $region61: #{tpu_custom_call.1} parent=59 // pred_check
          %p372 = pneg %p172
        $region62: #{tpu_custom_call.1} parent=59 // pred_check_branch
          %374 = sbr.rel (%p372) target = $region64
        $region63: #{tpu_custom_call.1} parent=59 // pred_region
          %376 = dma.done [#allocation4], 128
        $region64: #{tpu_custom_call.1} parent=59 // pred_fallthru
          _
        // Predicated region
        $region65: #{tpu_custom_call.1} parent=59 // pred_check
          %p377 = pneg %p193
        $region66: #{tpu_custom_call.1} parent=59 // pred_check_branch
          %379 = sbr.rel (%p377) target = $region68
        $region67: #{tpu_custom_call.1} parent=59 // pred_region
          %381 = dma.done [#allocation5], 16
        $region68: #{tpu_custom_call.1} parent=59 // pred_fallthru
          _
        // Predicated region
        $region69: #{tpu_custom_call.1} parent=59 // pred_check
          %p382 = pneg %p214
        $region70: #{tpu_custom_call.1} parent=59 // pred_check_branch
          %384 = sbr.rel (%p382) target = $region72
        $region71: #{tpu_custom_call.1} parent=59 // pred_region
          %386 = dma.done [#allocation8], 16
        $region72: #{tpu_custom_call.1} parent=59 // pred_fallthru
          _
        %387 = sfence
        %p388 = scmp.lt.s32.totalorder %s31, 1
        %s389 = scalar_select %p388, %s31, 1
        %p390 = scmp.lt.s32.totalorder %s32, 0
        %s391 = scalar_select %p390, %s32, 0
        %s392 = sadd.s32 %s391, %s389
        %s393 = smul.addr %s392, 8
        %s394 = scalar_lea.vmem %s0, %s393
        %p395 = pneg %p62
        %p396 = pneg %p59
        %p397 = scmp.lt.s32.totalorder %s31, 1
        %s398 = scalar_select %p397, %s31, 1
        %s399 = smul.addr %s398, 8
        %s400 = scalar_lea.vmem %s1, %s399
        %p401 = pneg %p88
        %p402 = pneg %p85
        %p403 = pneg %p109
        %p404 = pneg %p106
        %p405 = pneg %p130
        %p406 = pneg %p127
        %p407 = pneg %p151
        %p408 = pneg %p148
        %p409 = pneg %p172
        %p410 = pneg %p169
        %p411 = pneg %p193
        %p412 = pneg %p190
        %p413 = pneg %p214
        %p414 = pneg %p211
        %p415 = pneg %p235
        %p416 = pneg %p232
        %p417 = pneg %p256
        %p418 = pneg %p253
        %p419 = pneg %p284
        %p420 = pneg %p281
        %s421 = sand.u32 %s271, 1
        %s422 = scalar_lea.sflag [#allocation3], %s421
        %s423 = sand.u32 %s271, 1
        %s424 = smul.addr %s423, 8
        %s425 = scalar_lea.vmem [#allocation9], %s424
        %p426 = scmp.lt.s32.totalorder %s31, 1
        %s427 = scalar_select %p426, %s31, 1
        %p428 = scmp.lt.s32.totalorder %s32, 0
        %s429 = scalar_select %p428, %s32, 0
        %s430 = sadd.s32 %s429, %s427
        %s431 = smul.addr %s430, 8
        %s432 = scalar_lea.vmem %s0, %s431
        %p433 = scmp.lt.s32.totalorder %s31, 1
        %s434 = scalar_select %p433, %s31, 1
        %s435 = smul.addr %s434, 8
        %s436 = scalar_lea.vmem %s1, %s435
        %v438 = vld [vmem:[%s432] sm:$0xff]
        %v439 = vpack.c.bf16 %v438, %v438
        %v440 = vld [vmem:[%s436] sm:$0xff]
        %v441 = vpack.c.bf16 %v440, %v440
        %v442 = vld [vmem:[%s2] sm:$0xf]
        %v443 = vld [vmem:[%s2 + $0x4] sm:$0xf]
        %v444 = vld [vmem:[%s2 + $0x8] sm:$0xf]
        %v445 = vld [vmem:[%s2 + $0xc] sm:$0xf]
        %v450 = vunpack.c.l.b16 %v442
        %v451 = vunpack.c.l.b16 %v443
        %v452 = vunpack.c.l.b16 %v444
        %v453 = vunpack.c.l.b16 %v445
        %v454 = vpack.c.b16 %v451, %v450
        %v455 = vpack.c.b16 %v453, %v452
        %vm458 = vcmask 261120
        %v460 = vsel %vm458, %v439, 0
        %462 = vmatpush.bf16.msra.mxu0 0
        %463 = vmatpush.bf16.msra.mxu0 0
        %464 = vmatpush.bf16.msra.mxu0 0
        %465 = vmatpush.bf16.msra.mxu0 0
        %466 = vmatpush.bf16.msra.mxu0 0
        %467 = vmatpush.bf16.msra.mxu0 0
        %468 = vmatpush.bf16.msra.mxu0 %v455
        %469 = vmatpush.bf16.msra.mxu0 %v454
        %470 = vmatmul.bf16.gmra.mxu0 %v460
        %v471 = vpop.f32.mrf.mxu0
        %v472 = vadd.f32 0.0, %v471
        %v473 = vpop.f32.mrf.mxu0
        %474 = vdwg.mxu0
        %v475 = vld [vmem:[%s3] sm:$0xf]
        %v476 = vld [vmem:[%s3 + $0x4] sm:$0xf]
        %v477 = vld [vmem:[%s3 + $0x8] sm:$0xf]
        %v478 = vld [vmem:[%s3 + $0xc] sm:$0xf]
        %v483 = vunpack.c.l.b16 %v475
        %v484 = vunpack.c.l.b16 %v476
        %v485 = vunpack.c.l.b16 %v477
        %v486 = vunpack.c.l.b16 %v478
        %v487 = vpack.c.b16 %v484, %v483
        %v488 = vpack.c.b16 %v486, %v485
        %v492 = vsel %vm458, %v441, 0
        %494 = vmatpush.bf16.msra.mxu0 0
        %495 = vmatpush.bf16.msra.mxu0 0
        %496 = vmatpush.bf16.msra.mxu0 0
        %497 = vmatpush.bf16.msra.mxu0 0
        %498 = vmatpush.bf16.msra.mxu0 0
        %499 = vmatpush.bf16.msra.mxu0 0
        %500 = vmatpush.bf16.msra.mxu0 %v488
        %501 = vmatpush.bf16.msra.mxu0 %v487
        %502 = vmatmul.bf16.gmra.mxu0 %v492
        %v503 = vpop.f32.mrf.mxu0
        %v504 = vadd.f32 0.0, %v503
        %v505 = vpop.f32.mrf.mxu0
        %506 = vdwg.mxu0
        %v507 = vld [vmem:[%s4] sm:$0xf]
        %v508 = vld [vmem:[%s4 + $0x4] sm:$0xf]
        %v509 = vld [vmem:[%s4 + $0x8] sm:$0xf]
        %v510 = vld [vmem:[%s4 + $0xc] sm:$0xf]
        %v515 = vunpack.c.l.b16 %v507
        %v516 = vunpack.c.l.b16 %v508
        %v517 = vunpack.c.l.b16 %v509
        %v518 = vunpack.c.l.b16 %v510
        %v519 = vpack.c.b16 %v516, %v515
        %v520 = vpack.c.b16 %v518, %v517
        %523 = vmatpush.bf16.msra.mxu0 0
        %524 = vmatpush.bf16.msra.mxu0 0
        %525 = vmatpush.bf16.msra.mxu0 0
        %526 = vmatpush.bf16.msra.mxu0 0
        %527 = vmatpush.bf16.msra.mxu0 0
        %528 = vmatpush.bf16.msra.mxu0 0
        %529 = vmatpush.bf16.msra.mxu0 %v520
        %530 = vmatpush.bf16.msra.mxu0 %v519
        %531 = vmatmul.bf16.gmra.mxu0 %v492
        %v532 = vpop.f32.mrf.mxu0
        %v533 = vadd.f32 0.0, %v532
        %v534 = vpop.f32.mrf.mxu0
        %535 = vdwg.mxu0
        %v536 = vpack.c.bf16 %v472, %v472
        %v537 = vpack.c.bf16 %v504, %v504
        %v538 = vpack.c.bf16 %v533, %v533
        %vm539 = vcmask 130048
        %v541 = vsel %vm539, %v536, 0
        %v544 = vsel %vm539, %v537, 0
        %546 = vmatpush.bf16.xpose.msra.mxu0 0
        %547 = vmatpush.bf16.xpose.msra.mxu0 0
        %548 = vmatpush.bf16.xpose.msra.mxu0 0
        %549 = vmatpush.bf16.xpose.msra.mxu0 0
        %550 = vmatpush.bf16.xpose.msra.mxu0 0
        %551 = vmatpush.bf16.xpose.msra.mxu0 0
        %552 = vmatpush.bf16.xpose.msra.mxu0 0
        %553 = vmatpush.bf16.xpose.msra.mxu0 %v544
        %554 = vmatmul.bf16.gmra.mxu0 %v541
        %v555 = vpop.f32.mrf.mxu0
        %v556 = vadd.f32 0.0, %v555
        %v557 = vpop.f32.mrf.mxu0
        %558 = vdwg.mxu0
        %vm559 = vcmask 64512
        %v560 = vsel %vm559, %v556, -inf
        %561 = vmax.xlane.f32.xlu0 %v560
        %v562 = vpop.xlane.xlu0 %561
        %v563 = vsub.f32 %v556, %v562
        %v564 = vmul.f32 %v563, 1.442695
        %v565 = vpow.pop %v564
        %v566 = vsel %vm559, %v565, 0.0
        %567 = vadd.xlane.f32.xlu0 %v566
        %v568 = vpop.xlane.xlu0 %567
        %v569 = vrcp.pop %v568
        %v570 = vmul.f32 %v565, %v569
        %v572 = vunpack.c.l.b16 %v536
        %v573 = vpack.c.b16 %v572, %v572
        %574 = vrot.lane.b32.xlu0 %v573, 112
        %v575 = vpop.permute.xlu0 %574
        %v577 = vunpack.c.l.b16 %v537
        %v578 = vpack.c.b16 %v577, %v577
        %579 = vrot.lane.b32.xlu0 %v578, 112
        %v580 = vpop.permute.xlu0 %579
        %v582 = vsel %vm539, %v575, 0
        %v585 = vsel %vm539, %v580, 0
        %587 = vmatpush.bf16.xpose.msra.mxu0 0
        %588 = vmatpush.bf16.xpose.msra.mxu0 0
        %589 = vmatpush.bf16.xpose.msra.mxu0 0
        %590 = vmatpush.bf16.xpose.msra.mxu0 0
        %591 = vmatpush.bf16.xpose.msra.mxu0 0
        %592 = vmatpush.bf16.xpose.msra.mxu0 0
        %593 = vmatpush.bf16.xpose.msra.mxu0 0
        %594 = vmatpush.bf16.xpose.msra.mxu0 %v585
        %595 = vmatmul.bf16.gmra.mxu0 %v582
        %v596 = vpop.f32.mrf.mxu0
        %v597 = vadd.f32 0.0, %v596
        %v598 = vpop.f32.mrf.mxu0
        %599 = vdwg.mxu0
        %v600 = vsel %vm559, %v597, -inf
        %601 = vmax.xlane.f32.xlu0 %v600
        %v602 = vpop.xlane.xlu0 %601
        %v603 = vsub.f32 %v597, %v602
        %v604 = vmul.f32 %v603, 1.442695
        %v605 = vpow.pop %v604
        %v606 = vsel %vm559, %v605, 0.0
        %607 = vadd.xlane.f32.xlu0 %v606
        %v608 = vpop.xlane.xlu0 %607
        %v609 = vrcp.pop %v608
        %v610 = vmul.f32 %v605, %v609
        %611 = vrot.lane.b32.xlu0 %v573, 96
        %v612 = vpop.permute.xlu0 %611
        %613 = vrot.lane.b32.xlu0 %v578, 96
        %v614 = vpop.permute.xlu0 %613
        %v616 = vsel %vm539, %v612, 0
        %v619 = vsel %vm539, %v614, 0
        %621 = vmatpush.bf16.xpose.msra.mxu0 0
        %622 = vmatpush.bf16.xpose.msra.mxu0 0
        %623 = vmatpush.bf16.xpose.msra.mxu0 0
        %624 = vmatpush.bf16.xpose.msra.mxu0 0
        %625 = vmatpush.bf16.xpose.msra.mxu0 0
        %626 = vmatpush.bf16.xpose.msra.mxu0 0
        %627 = vmatpush.bf16.xpose.msra.mxu0 0
        %628 = vmatpush.bf16.xpose.msra.mxu0 %v619
        %629 = vmatmul.bf16.gmra.mxu0 %v616
        %v630 = vpop.f32.mrf.mxu0
        %v631 = vadd.f32 0.0, %v630
        %v632 = vpop.f32.mrf.mxu0
        %633 = vdwg.mxu0
        %v634 = vsel %vm559, %v631, -inf
        %635 = vmax.xlane.f32.xlu0 %v634
        %v636 = vpop.xlane.xlu0 %635
        %v637 = vsub.f32 %v631, %v636
        %v638 = vmul.f32 %v637, 1.442695
        %v639 = vpow.pop %v638
        %v640 = vsel %vm559, %v639, 0.0
        %641 = vadd.xlane.f32.xlu0 %v640
        %v642 = vpop.xlane.xlu0 %641
        %v643 = vrcp.pop %v642
        %v644 = vmul.f32 %v639, %v643
        %645 = vrot.lane.b32.xlu0 %v573, 80
        %v646 = vpop.permute.xlu0 %645
        %647 = vrot.lane.b32.xlu0 %v578, 80
        %v648 = vpop.permute.xlu0 %647
        %v650 = vsel %vm539, %v646, 0
        %v653 = vsel %vm539, %v648, 0
        %655 = vmatpush.bf16.xpose.msra.mxu0 0
        %656 = vmatpush.bf16.xpose.msra.mxu0 0
        %657 = vmatpush.bf16.xpose.msra.mxu0 0
        %658 = vmatpush.bf16.xpose.msra.mxu0 0
        %659 = vmatpush.bf16.xpose.msra.mxu0 0
        %660 = vmatpush.bf16.xpose.msra.mxu0 0
        %661 = vmatpush.bf16.xpose.msra.mxu0 0
        %662 = vmatpush.bf16.xpose.msra.mxu0 %v653
        %663 = vmatmul.bf16.gmra.mxu0 %v650
        %v664 = vpop.f32.mrf.mxu0
        %v665 = vadd.f32 0.0, %v664
        %v666 = vpop.f32.mrf.mxu0
        %667 = vdwg.mxu0
        %v668 = vsel %vm559, %v665, -inf
        %669 = vmax.xlane.f32.xlu0 %v668
        %v670 = vpop.xlane.xlu0 %669
        %v671 = vsub.f32 %v665, %v670
        %v672 = vmul.f32 %v671, 1.442695
        %v673 = vpow.pop %v672
        %v674 = vsel %vm559, %v673, 0.0
        %675 = vadd.xlane.f32.xlu0 %v674
        %v676 = vpop.xlane.xlu0 %675
        %v677 = vrcp.pop %v676
        %v678 = vmul.f32 %v673, %v677
        %679 = vrot.lane.b32.xlu0 %v573, 64
        %v680 = vpop.permute.xlu0 %679
        %681 = vrot.lane.b32.xlu0 %v578, 64
        %v682 = vpop.permute.xlu0 %681
        %v684 = vsel %vm539, %v680, 0
        %v687 = vsel %vm539, %v682, 0
        %689 = vmatpush.bf16.xpose.msra.mxu0 0
        %690 = vmatpush.bf16.xpose.msra.mxu0 0
        %691 = vmatpush.bf16.xpose.msra.mxu0 0
        %692 = vmatpush.bf16.xpose.msra.mxu0 0
        %693 = vmatpush.bf16.xpose.msra.mxu0 0
        %694 = vmatpush.bf16.xpose.msra.mxu0 0
        %695 = vmatpush.bf16.xpose.msra.mxu0 0
        %696 = vmatpush.bf16.xpose.msra.mxu0 %v687
        %697 = vmatmul.bf16.gmra.mxu0 %v684
        %v698 = vpop.f32.mrf.mxu0
        %v699 = vadd.f32 0.0, %v698
        %v700 = vpop.f32.mrf.mxu0
        %701 = vdwg.mxu0
        %v702 = vsel %vm559, %v699, -inf
        %703 = vmax.xlane.f32.xlu0 %v702
        %v704 = vpop.xlane.xlu0 %703
        %v705 = vsub.f32 %v699, %v704
        %v706 = vmul.f32 %v705, 1.442695
        %v707 = vpow.pop %v706
        %v708 = vsel %vm559, %v707, 0.0
        %709 = vadd.xlane.f32.xlu0 %v708
        %v710 = vpop.xlane.xlu0 %709
        %v711 = vrcp.pop %v710
        %v712 = vmul.f32 %v707, %v711
        %713 = vrot.lane.b32.xlu0 %v573, 48
        %v714 = vpop.permute.xlu0 %713
        %715 = vrot.lane.b32.xlu0 %v578, 48
        %v716 = vpop.permute.xlu0 %715
        %v718 = vsel %vm539, %v714, 0
        %v721 = vsel %vm539, %v716, 0
        %723 = vmatpush.bf16.xpose.msra.mxu0 0
        %724 = vmatpush.bf16.xpose.msra.mxu0 0
        %725 = vmatpush.bf16.xpose.msra.mxu0 0
        %726 = vmatpush.bf16.xpose.msra.mxu0 0
        %727 = vmatpush.bf16.xpose.msra.mxu0 0
        %728 = vmatpush.bf16.xpose.msra.mxu0 0
        %729 = vmatpush.bf16.xpose.msra.mxu0 0
        %730 = vmatpush.bf16.xpose.msra.mxu0 %v721
        %731 = vmatmul.bf16.gmra.mxu0 %v718
        %v732 = vpop.f32.mrf.mxu0
        %v733 = vadd.f32 0.0, %v732
        %v734 = vpop.f32.mrf.mxu0
        %735 = vdwg.mxu0
        %v736 = vsel %vm559, %v733, -inf
        %737 = vmax.xlane.f32.xlu0 %v736
        %v738 = vpop.xlane.xlu0 %737
        %v739 = vsub.f32 %v733, %v738
        %v740 = vmul.f32 %v739, 1.442695
        %v741 = vpow.pop %v740
        %v742 = vsel %vm559, %v741, 0.0
        %743 = vadd.xlane.f32.xlu0 %v742
        %v744 = vpop.xlane.xlu0 %743
        %v745 = vrcp.pop %v744
        %v746 = vmul.f32 %v741, %v745
        %747 = vrot.lane.b32.xlu0 %v573, 32
        %v748 = vpop.permute.xlu0 %747
        %749 = vrot.lane.b32.xlu0 %v578, 32
        %v750 = vpop.permute.xlu0 %749
        %v752 = vsel %vm539, %v748, 0
        %v755 = vsel %vm539, %v750, 0
        %757 = vmatpush.bf16.xpose.msra.mxu0 0
        %758 = vmatpush.bf16.xpose.msra.mxu0 0
        %759 = vmatpush.bf16.xpose.msra.mxu0 0
        %760 = vmatpush.bf16.xpose.msra.mxu0 0
        %761 = vmatpush.bf16.xpose.msra.mxu0 0
        %762 = vmatpush.bf16.xpose.msra.mxu0 0
        %763 = vmatpush.bf16.xpose.msra.mxu0 0
        %764 = vmatpush.bf16.xpose.msra.mxu0 %v755
        %765 = vmatmul.bf16.gmra.mxu0 %v752
        %v766 = vpop.f32.mrf.mxu0
        %v767 = vadd.f32 0.0, %v766
        %v768 = vpop.f32.mrf.mxu0
        %769 = vdwg.mxu0
        %v770 = vsel %vm559, %v767, -inf
        %771 = vmax.xlane.f32.xlu0 %v770
        %v772 = vpop.xlane.xlu0 %771
        %v773 = vsub.f32 %v767, %v772
        %v774 = vmul.f32 %v773, 1.442695
        %v775 = vpow.pop %v774
        %v776 = vsel %vm559, %v775, 0.0
        %777 = vadd.xlane.f32.xlu0 %v776
        %v778 = vpop.xlane.xlu0 %777
        %v779 = vrcp.pop %v778
        %v780 = vmul.f32 %v775, %v779
        %781 = vrot.lane.b32.xlu0 %v573, 16
        %v782 = vpop.permute.xlu0 %781
        %783 = vrot.lane.b32.xlu0 %v578, 16
        %v784 = vpop.permute.xlu0 %783
        %v786 = vsel %vm539, %v782, 0
        %v789 = vsel %vm539, %v784, 0
        %791 = vmatpush.bf16.xpose.msra.mxu0 0
        %792 = vmatpush.bf16.xpose.msra.mxu0 0
        %793 = vmatpush.bf16.xpose.msra.mxu0 0
        %794 = vmatpush.bf16.xpose.msra.mxu0 0
        %795 = vmatpush.bf16.xpose.msra.mxu0 0
        %796 = vmatpush.bf16.xpose.msra.mxu0 0
        %797 = vmatpush.bf16.xpose.msra.mxu0 0
        %798 = vmatpush.bf16.xpose.msra.mxu0 %v789
        %799 = vmatmul.bf16.gmra.mxu0 %v786
        %v800 = vpop.f32.mrf.mxu0
        %v801 = vadd.f32 0.0, %v800
        %v802 = vpop.f32.mrf.mxu0
        %803 = vdwg.mxu0
        %v804 = vsel %vm559, %v801, -inf
        %805 = vmax.xlane.f32.xlu0 %v804
        %v806 = vpop.xlane.xlu0 %805
        %v807 = vsub.f32 %v801, %v806
        %v808 = vmul.f32 %v807, 1.442695
        %v809 = vpow.pop %v808
        %v810 = vsel %vm559, %v809, 0.0
        %811 = vadd.xlane.f32.xlu0 %v810
        %v812 = vpop.xlane.xlu0 %811
        %v813 = vrcp.pop %v812
        %v814 = vmul.f32 %v809, %v813
        %s815 = sld [smem:[#allocation2]]
        %v816 = vstv %s815
        %v817 = vmul.f32 %v570, %v816
        %s818 = sld [smem:[#allocation2 + $0x80]]
        %v819 = vstv %s818
        %v820 = vmul.f32 %v610, %v819
        %v821 = vadd.f32 %v817, %v820
        %s822 = sld [smem:[#allocation2 + $0x100]]
        %v823 = vstv %s822
        %v824 = vmul.f32 %v644, %v823
        %v825 = vadd.f32 %v821, %v824
        %s826 = sld [smem:[#allocation2 + $0x180]]
        %v827 = vstv %s826
        %v828 = vmul.f32 %v678, %v827
        %v829 = vadd.f32 %v825, %v828
        %s830 = sld [smem:[#allocation2 + $0x200]]
        %v831 = vstv %s830
        %v832 = vmul.f32 %v712, %v831
        %v833 = vadd.f32 %v829, %v832
        %s834 = sld [smem:[#allocation2 + $0x280]]
        %v835 = vstv %s834
        %v836 = vmul.f32 %v746, %v835
        %v837 = vadd.f32 %v833, %v836
        %s838 = sld [smem:[#allocation2 + $0x300]]
        %v839 = vstv %s838
        %v840 = vmul.f32 %v780, %v839
        %v841 = vadd.f32 %v837, %v840
        %s842 = sld [smem:[#allocation2 + $0x380]]
        %v843 = vstv %s842
        %v844 = vmul.f32 %v814, %v843
        %v845 = vadd.f32 %v841, %v844
        %s846 = sld [smem:[#allocation2 + $0x1]]
        %v847 = vstv %s846
        %v848 = vmul.f32 %v570, %v847
        %s849 = sld [smem:[#allocation2 + $0x81]]
        %v850 = vstv %s849
        %v851 = vmul.f32 %v610, %v850
        %v852 = vadd.f32 %v848, %v851
        %s853 = sld [smem:[#allocation2 + $0x101]]
        %v854 = vstv %s853
        %v855 = vmul.f32 %v644, %v854
        %v856 = vadd.f32 %v852, %v855
        %s857 = sld [smem:[#allocation2 + $0x181]]
        %v858 = vstv %s857
        %v859 = vmul.f32 %v678, %v858
        %v860 = vadd.f32 %v856, %v859
        %s861 = sld [smem:[#allocation2 + $0x201]]
        %v862 = vstv %s861
        %v863 = vmul.f32 %v712, %v862
        %v864 = vadd.f32 %v860, %v863
        %s865 = sld [smem:[#allocation2 + $0x281]]
        %v866 = vstv %s865
        %v867 = vmul.f32 %v746, %v866
        %v868 = vadd.f32 %v864, %v867
        %s869 = sld [smem:[#allocation2 + $0x301]]
        %v870 = vstv %s869
        %v871 = vmul.f32 %v780, %v870
        %v872 = vadd.f32 %v868, %v871
        %s873 = sld [smem:[#allocation2 + $0x381]]
        %v874 = vstv %s873
        %v875 = vmul.f32 %v814, %v874
        %v876 = vadd.f32 %v872, %v875
        %s877 = sld [smem:[#allocation2 + $0x2]]
        %v878 = vstv %s877
        %v879 = vmul.f32 %v570, %v878
        %s880 = sld [smem:[#allocation2 + $0x82]]
        %v881 = vstv %s880
        %v882 = vmul.f32 %v610, %v881
        %v883 = vadd.f32 %v879, %v882
        %s884 = sld [smem:[#allocation2 + $0x102]]
        %v885 = vstv %s884
        %v886 = vmul.f32 %v644, %v885
        %v887 = vadd.f32 %v883, %v886
        %s888 = sld [smem:[#allocation2 + $0x182]]
        %v889 = vstv %s888
        %v890 = vmul.f32 %v678, %v889
        %v891 = vadd.f32 %v887, %v890
        %s892 = sld [smem:[#allocation2 + $0x202]]
        %v893 = vstv %s892
        %v894 = vmul.f32 %v712, %v893
        %v895 = vadd.f32 %v891, %v894
        %s896 = sld [smem:[#allocation2 + $0x282]]
        %v897 = vstv %s896
        %v898 = vmul.f32 %v746, %v897
        %v899 = vadd.f32 %v895, %v898
        %s900 = sld [smem:[#allocation2 + $0x302]]
        %v901 = vstv %s900
        %v902 = vmul.f32 %v780, %v901
        %v903 = vadd.f32 %v899, %v902
        %s904 = sld [smem:[#allocation2 + $0x382]]
        %v905 = vstv %s904
        %v906 = vmul.f32 %v814, %v905
        %v907 = vadd.f32 %v903, %v906
        %s908 = sld [smem:[#allocation2 + $0x3]]
        %v909 = vstv %s908
        %v910 = vmul.f32 %v570, %v909
        %s911 = sld [smem:[#allocation2 + $0x83]]
        %v912 = vstv %s911
        %v913 = vmul.f32 %v610, %v912
        %v914 = vadd.f32 %v910, %v913
        %s915 = sld [smem:[#allocation2 + $0x103]]
        %v916 = vstv %s915
        %v917 = vmul.f32 %v644, %v916
        %v918 = vadd.f32 %v914, %v917
        %s919 = sld [smem:[#allocation2 + $0x183]]
        %v920 = vstv %s919
        %v921 = vmul.f32 %v678, %v920
        %v922 = vadd.f32 %v918, %v921
        %s923 = sld [smem:[#allocation2 + $0x203]]
        %v924 = vstv %s923
        %v925 = vmul.f32 %v712, %v924
        %v926 = vadd.f32 %v922, %v925
        %s927 = sld [smem:[#allocation2 + $0x283]]
        %v928 = vstv %s927
        %v929 = vmul.f32 %v746, %v928
        %v930 = vadd.f32 %v926, %v929
        %s931 = sld [smem:[#allocation2 + $0x303]]
        %v932 = vstv %s931
        %v933 = vmul.f32 %v780, %v932
        %v934 = vadd.f32 %v930, %v933
        %s935 = sld [smem:[#allocation2 + $0x383]]
        %v936 = vstv %s935
        %v937 = vmul.f32 %v814, %v936
        %v938 = vadd.f32 %v934, %v937
        %s939 = sld [smem:[#allocation2 + $0x4]]
        %v940 = vstv %s939
        %v941 = vmul.f32 %v570, %v940
        %s942 = sld [smem:[#allocation2 + $0x84]]
        %v943 = vstv %s942
        %v944 = vmul.f32 %v610, %v943
        %v945 = vadd.f32 %v941, %v944
        %s946 = sld [smem:[#allocation2 + $0x104]]
        %v947 = vstv %s946
        %v948 = vmul.f32 %v644, %v947
        %v949 = vadd.f32 %v945, %v948
        %s950 = sld [smem:[#allocation2 + $0x184]]
        %v951 = vstv %s950
        %v952 = vmul.f32 %v678, %v951
        %v953 = vadd.f32 %v949, %v952
        %s954 = sld [smem:[#allocation2 + $0x204]]
        %v955 = vstv %s954
        %v956 = vmul.f32 %v712, %v955
        %v957 = vadd.f32 %v953, %v956
        %s958 = sld [smem:[#allocation2 + $0x284]]
        %v959 = vstv %s958
        %v960 = vmul.f32 %v746, %v959
        %v961 = vadd.f32 %v957, %v960
        %s962 = sld [smem:[#allocation2 + $0x304]]
        %v963 = vstv %s962
        %v964 = vmul.f32 %v780, %v963
        %v965 = vadd.f32 %v961, %v964
        %s966 = sld [smem:[#allocation2 + $0x384]]
        %v967 = vstv %s966
        %v968 = vmul.f32 %v814, %v967
        %v969 = vadd.f32 %v965, %v968
        %s970 = sld [smem:[#allocation2 + $0x5]]
        %v971 = vstv %s970
        %v972 = vmul.f32 %v570, %v971
        %s973 = sld [smem:[#allocation2 + $0x85]]
        %v974 = vstv %s973
        %v975 = vmul.f32 %v610, %v974
        %v976 = vadd.f32 %v972, %v975
        %s977 = sld [smem:[#allocation2 + $0x105]]
        %v978 = vstv %s977
        %v979 = vmul.f32 %v644, %v978
        %v980 = vadd.f32 %v976, %v979
        %s981 = sld [smem:[#allocation2 + $0x185]]
        %v982 = vstv %s981
        %v983 = vmul.f32 %v678, %v982
        %v984 = vadd.f32 %v980, %v983
        %s985 = sld [smem:[#allocation2 + $0x205]]
        %v986 = vstv %s985
        %v987 = vmul.f32 %v712, %v986
        %v988 = vadd.f32 %v984, %v987
        %s989 = sld [smem:[#allocation2 + $0x285]]
        %v990 = vstv %s989
        %v991 = vmul.f32 %v746, %v990
        %v992 = vadd.f32 %v988, %v991
        %s993 = sld [smem:[#allocation2 + $0x305]]
        %v994 = vstv %s993
        %v995 = vmul.f32 %v780, %v994
        %v996 = vadd.f32 %v992, %v995
        %s997 = sld [smem:[#allocation2 + $0x385]]
        %v998 = vstv %s997
        %v999 = vmul.f32 %v814, %v998
        %v1000 = vadd.f32 %v996, %v999
        %s1001 = sld [smem:[#allocation2 + $0x6]]
        %v1002 = vstv %s1001
        %v1003 = vmul.f32 %v570, %v1002
        %s1004 = sld [smem:[#allocation2 + $0x86]]
        %v1005 = vstv %s1004
        %v1006 = vmul.f32 %v610, %v1005
        %v1007 = vadd.f32 %v1003, %v1006
        %s1008 = sld [smem:[#allocation2 + $0x106]]
        %v1009 = vstv %s1008
        %v1010 = vmul.f32 %v644, %v1009
        %v1011 = vadd.f32 %v1007, %v1010
        %s1012 = sld [smem:[#allocation2 + $0x186]]
        %v1013 = vstv %s1012
        %v1014 = vmul.f32 %v678, %v1013
        %v1015 = vadd.f32 %v1011, %v1014
        %s1016 = sld [smem:[#allocation2 + $0x206]]
        %v1017 = vstv %s1016
        %v1018 = vmul.f32 %v712, %v1017
        %v1019 = vadd.f32 %v1015, %v1018
        %s1020 = sld [smem:[#allocation2 + $0x286]]
        %v1021 = vstv %s1020
        %v1022 = vmul.f32 %v746, %v1021
        %v1023 = vadd.f32 %v1019, %v1022
        %s1024 = sld [smem:[#allocation2 + $0x306]]
        %v1025 = vstv %s1024
        %v1026 = vmul.f32 %v780, %v1025
        %v1027 = vadd.f32 %v1023, %v1026
        %s1028 = sld [smem:[#allocation2 + $0x386]]
        %v1029 = vstv %s1028
        %v1030 = vmul.f32 %v814, %v1029
        %v1031 = vadd.f32 %v1027, %v1030
        %s1032 = sld [smem:[#allocation2 + $0x7]]
        %v1033 = vstv %s1032
        %v1034 = vmul.f32 %v570, %v1033
        %s1035 = sld [smem:[#allocation2 + $0x87]]
        %v1036 = vstv %s1035
        %v1037 = vmul.f32 %v610, %v1036
        %v1038 = vadd.f32 %v1034, %v1037
        %s1039 = sld [smem:[#allocation2 + $0x107]]
        %v1040 = vstv %s1039
        %v1041 = vmul.f32 %v644, %v1040
        %v1042 = vadd.f32 %v1038, %v1041
        %s1043 = sld [smem:[#allocation2 + $0x187]]
        %v1044 = vstv %s1043
        %v1045 = vmul.f32 %v678, %v1044
        %v1046 = vadd.f32 %v1042, %v1045
        %s1047 = sld [smem:[#allocation2 + $0x207]]
        %v1048 = vstv %s1047
        %v1049 = vmul.f32 %v712, %v1048
        %v1050 = vadd.f32 %v1046, %v1049
        %s1051 = sld [smem:[#allocation2 + $0x287]]
        %v1052 = vstv %s1051
        %v1053 = vmul.f32 %v746, %v1052
        %v1054 = vadd.f32 %v1050, %v1053
        %s1055 = sld [smem:[#allocation2 + $0x307]]
        %v1056 = vstv %s1055
        %v1057 = vmul.f32 %v780, %v1056
        %v1058 = vadd.f32 %v1054, %v1057
        %s1059 = sld [smem:[#allocation2 + $0x387]]
        %v1060 = vstv %s1059
        %v1061 = vmul.f32 %v814, %v1060
        %v1062 = vadd.f32 %v1058, %v1061
        %v1063 = vadd.f32 %v845, %v876
        %v1064 = vadd.f32 %v1063, %v907
        %v1065 = vadd.f32 %v1064, %v938
        %v1066 = vadd.f32 %v1065, %v969
        %v1067 = vadd.f32 %v1066, %v1000
        %v1068 = vadd.f32 %v1067, %v1031
        %v1069 = vadd.f32 %v1068, %v1062
        %v1070 = vmul.f32 %v1069, 0.125
        %v1071 = vsub.f32 %v845, %v1070
        %v1072 = vmul.f32 %v1071, %v1071
        %v1073 = vsub.f32 %v876, %v1070
        %v1074 = vmul.f32 %v1073, %v1073
        %v1075 = vadd.f32 %v1072, %v1074
        %v1076 = vsub.f32 %v907, %v1070
        %v1077 = vmul.f32 %v1076, %v1076
        %v1078 = vadd.f32 %v1075, %v1077
        %v1079 = vsub.f32 %v938, %v1070
        %v1080 = vmul.f32 %v1079, %v1079
        %v1081 = vadd.f32 %v1078, %v1080
        %v1082 = vsub.f32 %v969, %v1070
        %v1083 = vmul.f32 %v1082, %v1082
        %v1084 = vadd.f32 %v1081, %v1083
        %v1085 = vsub.f32 %v1000, %v1070
        %v1086 = vmul.f32 %v1085, %v1085
        %v1087 = vadd.f32 %v1084, %v1086
        %v1088 = vsub.f32 %v1031, %v1070
        %v1089 = vmul.f32 %v1088, %v1088
        %v1090 = vadd.f32 %v1087, %v1089
        %v1091 = vsub.f32 %v1062, %v1070
        %v1092 = vmul.f32 %v1091, %v1091
        %v1093 = vadd.f32 %v1090, %v1092
        %v1094 = vmul.f32 %v1093, 0.125
        %v1095 = vadd.f32 %v1094, 1e-05
        %v1096 = vrsqrt.pop %v1095
        %v1097 = vmul.f32 %v1096, %v1095
        %v1098 = vmul.f32 %v1097, %v1096
        %v1099 = vmul.f32 0.5, %v1098
        %v1100 = vsub.f32 1.5, %v1099
        %v1101 = vmul.f32 %v1096, %v1100
        %vm1102 = vweird.f32 %v1095
        %vm1103 = vweird.f32 %v1096
        %vm1104 = vmor %vm1102, %vm1103
        %v1105 = vsel %vm1104, %v1096, %v1101
        %v1106 = vmul.f32 %v1071, %v1105
        %s1107 = sld [smem:[#allocation6]]
        %v1108 = vstv %s1107
        %v1109 = vmul.f32 %v1106, %v1108
        %s1110 = sld [smem:[#allocation7]]
        %v1111 = vstv %s1110
        %v1112 = vadd.f32 %v1109, %v1111
        %v1113 = vpack.c.bf16 %v1112, %v1112
        %v1115 = vsel %vm559, %v1113, 0
        %vm1117 = vcmask 1043456
        %v1119 = vsel %vm1117, %v538, 0
        %1121 = vmatpush.bf16.msra.mxu0 0
        %1122 = vmatpush.bf16.msra.mxu0 0
        %1123 = vmatpush.bf16.msra.mxu0 0
        %1124 = vmatpush.bf16.msra.mxu0 0
        %1125 = vmatpush.bf16.msra.mxu0 0
        %1126 = vmatpush.bf16.msra.mxu0 0
        %1127 = vmatpush.bf16.msra.mxu0 0
        %1128 = vmatpush.bf16.msra.mxu0 %v1119
        %1129 = vmatmul.bf16.gmra.mxu0 %v1115
        %v1130 = vpop.f32.mrf.mxu0
        %v1131 = vadd.f32 0.0, %v1130
        %v1132 = vpop.f32.mrf.mxu0
        %1133 = vdwg.mxu0
        %v1134 = vmul.f32 %v1073, %v1105
        %s1135 = sld [smem:[#allocation6 + $0x1]]
        %v1136 = vstv %s1135
        %v1137 = vmul.f32 %v1134, %v1136
        %s1138 = sld [smem:[#allocation7 + $0x1]]
        %v1139 = vstv %s1138
        %v1140 = vadd.f32 %v1137, %v1139
        %v1141 = vpack.c.bf16 %v1140, %v1140
        %v1143 = vunpack.c.l.b16 %v538
        %v1144 = vpack.c.b16 %v1143, %v1143
        %1145 = vrot.lane.b32.xlu0 %v1144, 112
        %v1146 = vpop.permute.xlu0 %1145
        %v1148 = vsel %vm559, %v1141, 0
        %v1151 = vsel %vm1117, %v1146, 0
        %1153 = vmatpush.bf16.msra.mxu0 0
        %1154 = vmatpush.bf16.msra.mxu0 0
        %1155 = vmatpush.bf16.msra.mxu0 0
        %1156 = vmatpush.bf16.msra.mxu0 0
        %1157 = vmatpush.bf16.msra.mxu0 0
        %1158 = vmatpush.bf16.msra.mxu0 0
        %1159 = vmatpush.bf16.msra.mxu0 0
        %1160 = vmatpush.bf16.msra.mxu0 %v1151
        %1161 = vmatmul.bf16.gmra.mxu0 %v1148
        %v1162 = vpop.f32.mrf.mxu0
        %v1163 = vadd.f32 0.0, %v1162
        %v1164 = vpop.f32.mrf.mxu0
        %1165 = vdwg.mxu0
        %v1166 = vmul.f32 %v1076, %v1105
        %s1167 = sld [smem:[#allocation6 + $0x2]]
        %v1168 = vstv %s1167
        %v1169 = vmul.f32 %v1166, %v1168
        %s1170 = sld [smem:[#allocation7 + $0x2]]
        %v1171 = vstv %s1170
        %v1172 = vadd.f32 %v1169, %v1171
        %v1173 = vpack.c.bf16 %v1172, %v1172
        %1174 = vrot.lane.b32.xlu0 %v1144, 96
        %v1175 = vpop.permute.xlu0 %1174
        %v1177 = vsel %vm559, %v1173, 0
        %v1180 = vsel %vm1117, %v1175, 0
        %1182 = vmatpush.bf16.msra.mxu0 0
        %1183 = vmatpush.bf16.msra.mxu0 0
        %1184 = vmatpush.bf16.msra.mxu0 0
        %1185 = vmatpush.bf16.msra.mxu0 0
        %1186 = vmatpush.bf16.msra.mxu0 0
        %1187 = vmatpush.bf16.msra.mxu0 0
        %1188 = vmatpush.bf16.msra.mxu0 0
        %1189 = vmatpush.bf16.msra.mxu0 %v1180
        %1190 = vmatmul.bf16.gmra.mxu0 %v1177
        %v1191 = vpop.f32.mrf.mxu0
        %v1192 = vadd.f32 0.0, %v1191
        %v1193 = vpop.f32.mrf.mxu0
        %1194 = vdwg.mxu0
        %v1195 = vmul.f32 %v1079, %v1105
        %s1196 = sld [smem:[#allocation6 + $0x3]]
        %v1197 = vstv %s1196
        %v1198 = vmul.f32 %v1195, %v1197
        %s1199 = sld [smem:[#allocation7 + $0x3]]
        %v1200 = vstv %s1199
        %v1201 = vadd.f32 %v1198, %v1200
        %v1202 = vpack.c.bf16 %v1201, %v1201
        %1203 = vrot.lane.b32.xlu0 %v1144, 80
        %v1204 = vpop.permute.xlu0 %1203
        %v1206 = vsel %vm559, %v1202, 0
        %v1209 = vsel %vm1117, %v1204, 0
        %1211 = vmatpush.bf16.msra.mxu0 0
        %1212 = vmatpush.bf16.msra.mxu0 0
        %1213 = vmatpush.bf16.msra.mxu0 0
        %1214 = vmatpush.bf16.msra.mxu0 0
        %1215 = vmatpush.bf16.msra.mxu0 0
        %1216 = vmatpush.bf16.msra.mxu0 0
        %1217 = vmatpush.bf16.msra.mxu0 0
        %1218 = vmatpush.bf16.msra.mxu0 %v1209
        %1219 = vmatmul.bf16.gmra.mxu0 %v1206
        %v1220 = vpop.f32.mrf.mxu0
        %v1221 = vadd.f32 0.0, %v1220
        %v1222 = vpop.f32.mrf.mxu0
        %1223 = vdwg.mxu0
        %v1224 = vmul.f32 %v1082, %v1105
        %s1225 = sld [smem:[#allocation6 + $0x4]]
        %v1226 = vstv %s1225
        %v1227 = vmul.f32 %v1224, %v1226
        %s1228 = sld [smem:[#allocation7 + $0x4]]
        %v1229 = vstv %s1228
        %v1230 = vadd.f32 %v1227, %v1229
        %v1231 = vpack.c.bf16 %v1230, %v1230
        %1232 = vrot.lane.b32.xlu0 %v1144, 64
        %v1233 = vpop.permute.xlu0 %1232
        %v1235 = vsel %vm559, %v1231, 0
        %v1238 = vsel %vm1117, %v1233, 0
        %1240 = vmatpush.bf16.msra.mxu0 0
        %1241 = vmatpush.bf16.msra.mxu0 0
        %1242 = vmatpush.bf16.msra.mxu0 0
        %1243 = vmatpush.bf16.msra.mxu0 0
        %1244 = vmatpush.bf16.msra.mxu0 0
        %1245 = vmatpush.bf16.msra.mxu0 0
        %1246 = vmatpush.bf16.msra.mxu0 0
        %1247 = vmatpush.bf16.msra.mxu0 %v1238
        %1248 = vmatmul.bf16.gmra.mxu0 %v1235
        %v1249 = vpop.f32.mrf.mxu0
        %v1250 = vadd.f32 0.0, %v1249
        %v1251 = vpop.f32.mrf.mxu0
        %1252 = vdwg.mxu0
        %v1253 = vmul.f32 %v1085, %v1105
        %s1254 = sld [smem:[#allocation6 + $0x5]]
        %v1255 = vstv %s1254
        %v1256 = vmul.f32 %v1253, %v1255
        %s1257 = sld [smem:[#allocation7 + $0x5]]
        %v1258 = vstv %s1257
        %v1259 = vadd.f32 %v1256, %v1258
        %v1260 = vpack.c.bf16 %v1259, %v1259
        %1261 = vrot.lane.b32.xlu0 %v1144, 48
        %v1262 = vpop.permute.xlu0 %1261
        %v1264 = vsel %vm559, %v1260, 0
        %v1267 = vsel %vm1117, %v1262, 0
        %1269 = vmatpush.bf16.msra.mxu0 0
        %1270 = vmatpush.bf16.msra.mxu0 0
        %1271 = vmatpush.bf16.msra.mxu0 0
        %1272 = vmatpush.bf16.msra.mxu0 0
        %1273 = vmatpush.bf16.msra.mxu0 0
        %1274 = vmatpush.bf16.msra.mxu0 0
        %1275 = vmatpush.bf16.msra.mxu0 0
        %1276 = vmatpush.bf16.msra.mxu0 %v1267
        %1277 = vmatmul.bf16.gmra.mxu0 %v1264
        %v1278 = vpop.f32.mrf.mxu0
        %v1279 = vadd.f32 0.0, %v1278
        %v1280 = vpop.f32.mrf.mxu0
        %1281 = vdwg.mxu0
        %v1282 = vmul.f32 %v1088, %v1105
        %s1283 = sld [smem:[#allocation6 + $0x6]]
        %v1284 = vstv %s1283
        %v1285 = vmul.f32 %v1282, %v1284
        %s1286 = sld [smem:[#allocation7 + $0x6]]
        %v1287 = vstv %s1286
        %v1288 = vadd.f32 %v1285, %v1287
        %v1289 = vpack.c.bf16 %v1288, %v1288
        %1290 = vrot.lane.b32.xlu0 %v1144, 32
        %v1291 = vpop.permute.xlu0 %1290
        %v1293 = vsel %vm559, %v1289, 0
        %v1296 = vsel %vm1117, %v1291, 0
        %1298 = vmatpush.bf16.msra.mxu0 0
        %1299 = vmatpush.bf16.msra.mxu0 0
        %1300 = vmatpush.bf16.msra.mxu0 0
        %1301 = vmatpush.bf16.msra.mxu0 0
        %1302 = vmatpush.bf16.msra.mxu0 0
        %1303 = vmatpush.bf16.msra.mxu0 0
        %1304 = vmatpush.bf16.msra.mxu0 0
        %1305 = vmatpush.bf16.msra.mxu0 %v1296
        %1306 = vmatmul.bf16.gmra.mxu0 %v1293
        %v1307 = vpop.f32.mrf.mxu0
        %v1308 = vadd.f32 0.0, %v1307
        %v1309 = vpop.f32.mrf.mxu0
        %1310 = vdwg.mxu0
        %v1311 = vmul.f32 %v1091, %v1105
        %s1312 = sld [smem:[#allocation6 + $0x7]]
        %v1313 = vstv %s1312
        %v1314 = vmul.f32 %v1311, %v1313
        %s1315 = sld [smem:[#allocation7 + $0x7]]
        %v1316 = vstv %s1315
        %v1317 = vadd.f32 %v1314, %v1316
        %v1318 = vpack.c.bf16 %v1317, %v1317
        %1319 = vrot.lane.b32.xlu0 %v1144, 16
        %v1320 = vpop.permute.xlu0 %1319
        %v1322 = vsel %vm559, %v1318, 0
        %v1325 = vsel %vm1117, %v1320, 0
        %1327 = vmatpush.bf16.msra.mxu0 0
        %1328 = vmatpush.bf16.msra.mxu0 0
        %1329 = vmatpush.bf16.msra.mxu0 0
        %1330 = vmatpush.bf16.msra.mxu0 0
        %1331 = vmatpush.bf16.msra.mxu0 0
        %1332 = vmatpush.bf16.msra.mxu0 0
        %1333 = vmatpush.bf16.msra.mxu0 0
        %1334 = vmatpush.bf16.msra.mxu0 %v1325
        %1335 = vmatmul.bf16.gmra.mxu0 %v1322
        %v1336 = vpop.f32.mrf.mxu0
        %v1337 = vadd.f32 0.0, %v1336
        %v1338 = vpop.f32.mrf.mxu0
        %1339 = vdwg.mxu0
        %1341 = vrot.lane.b32.xlu0 %v1163, 16
        %v1342 = vpop.permute.xlu0 %1341
        %1345 = vrot.lane.b32.xlu0 %v1192, 32
        %v1346 = vpop.permute.xlu0 %1345
        %1349 = vrot.lane.b32.xlu0 %v1221, 48
        %v1350 = vpop.permute.xlu0 %1349
        %1353 = vrot.lane.b32.xlu0 %v1250, 64
        %v1354 = vpop.permute.xlu0 %1353
        %1357 = vrot.lane.b32.xlu0 %v1279, 80
        %v1358 = vpop.permute.xlu0 %1357
        %1361 = vrot.lane.b32.xlu0 %v1308, 96
        %v1362 = vpop.permute.xlu0 %1361
        %1365 = vrot.lane.b32.xlu0 %v1337, 112
        %v1366 = vpop.permute.xlu0 %1365
        %v1368 = vsel %vm539, %v1131, %v1342
        %v1369 = vsel %vm458, %v1368, %v1346
        %vm1370 = vcmask 392192
        %v1371 = vsel %vm1370, %v1369, %v1350
        %vm1372 = vcmask 523264
        %v1373 = vsel %vm1372, %v1371, %v1354
        %vm1374 = vcmask 654336
        %v1375 = vsel %vm1374, %v1373, %v1358
        %vm1376 = vcmask 785408
        %v1377 = vsel %vm1376, %v1375, %v1362
        %vm1378 = vcmask 916480
        %v1379 = vsel %vm1378, %v1377, %v1366
        %v1380 = vpack.c.bf16 %v1379, %v1379
        %v1381 = vld [vmem:[%s8] sm:$0xf]
        %v1382 = vld [vmem:[%s8 + $0x4] sm:$0xf]
        %v1383 = vld [vmem:[%s8 + $0x8] sm:$0xf]
        %v1384 = vld [vmem:[%s8 + $0xc] sm:$0xf]
        %v1385 = vld [vmem:[%s8 + $0x10] sm:$0xf]
        %v1386 = vld [vmem:[%s8 + $0x14] sm:$0xf]
        %v1387 = vld [vmem:[%s8 + $0x18] sm:$0xf]
        %v1388 = vld [vmem:[%s8 + $0x1c] sm:$0xf]
        %v1389 = vld [vmem:[%s8 + $0x20] sm:$0xf]
        %v1390 = vld [vmem:[%s8 + $0x24] sm:$0xf]
        %v1391 = vld [vmem:[%s8 + $0x28] sm:$0xf]
        %v1392 = vld [vmem:[%s8 + $0x2c] sm:$0xf]
        %v1393 = vld [vmem:[%s8 + $0x30] sm:$0xf]
        %v1394 = vld [vmem:[%s8 + $0x34] sm:$0xf]
        %v1395 = vld [vmem:[%s8 + $0x38] sm:$0xf]
        %v1396 = vld [vmem:[%s8 + $0x3c] sm:$0xf]
        %v1397 = vld [vmem:[%s9] sm:$0x1]
        %v1399 = vperm.slane %v1397, 0
        %v1417 = vunpack.c.l.b16 %v1381
        %v1418 = vunpack.c.l.b16 %v1382
        %v1419 = vunpack.c.l.b16 %v1383
        %v1420 = vunpack.c.l.b16 %v1384
        %v1421 = vunpack.c.l.b16 %v1385
        %v1422 = vunpack.c.l.b16 %v1386
        %v1423 = vunpack.c.l.b16 %v1387
        %v1424 = vunpack.c.l.b16 %v1388
        %v1425 = vunpack.c.l.b16 %v1389
        %v1426 = vunpack.c.l.b16 %v1390
        %v1427 = vunpack.c.l.b16 %v1391
        %v1428 = vunpack.c.l.b16 %v1392
        %v1429 = vunpack.c.l.b16 %v1393
        %v1430 = vunpack.c.l.b16 %v1394
        %v1431 = vunpack.c.l.b16 %v1395
        %v1432 = vunpack.c.l.b16 %v1396
        %v1433 = vpack.c.b16 %v1418, %v1417
        %v1434 = vpack.c.b16 %v1420, %v1419
        %v1435 = vpack.c.b16 %v1422, %v1421
        %v1436 = vpack.c.b16 %v1424, %v1423
        %v1437 = vpack.c.b16 %v1426, %v1425
        %v1438 = vpack.c.b16 %v1428, %v1427
        %v1439 = vpack.c.b16 %v1430, %v1429
        %v1440 = vpack.c.b16 %v1432, %v1431
        %1449 = vmatpush.bf16.msra.mxu0 %v1440
        %1450 = vmatpush.bf16.msra.mxu0 %v1439
        %1451 = vmatpush.bf16.msra.mxu0 %v1438
        %1452 = vmatpush.bf16.msra.mxu0 %v1437
        %1453 = vmatpush.bf16.msra.mxu0 %v1436
        %1454 = vmatpush.bf16.msra.mxu0 %v1435
        %1455 = vmatpush.bf16.msra.mxu0 %v1434
        %1456 = vmatpush.bf16.msra.mxu0 %v1433
        %1457 = vmatmul.bf16.gmra.mxu0 %v1380
        %v1458 = vpop.f32.mrf.mxu0
        %v1459 = vadd.f32 %v1399, %v1458
        %v1460 = vpop.f32.mrf.mxu0
        %1461 = vdwg.mxu0
        %1462 = vst.msk [vmem:[%s425] sm:$0xff] %vm458, %v1459
        %s1463 = sand.u32 %s271, 1
        %s1464 = scalar_lea.sflag [#allocation3], %s1463
        %s1465 = sand.u32 %s271, 1
        %s1466 = smul.addr %s1465, 8
        %s1467 = scalar_lea.vmem [#allocation9], %s1466
        // Predicated region
        $region73: #{tpu_custom_call.1} parent=59 // pred_check
          %p1468 = pneg %p281
        $region74: #{tpu_custom_call.1} parent=59 // pred_check_branch
          %1470 = sbr.rel (%p1468) target = $region76
        $region75: #{tpu_custom_call.1} parent=59 // pred_region
          %1472 = vsyncadd %s1464, 0
          %s1473 = sadd.s32 %s32, %s31
          %s1474 = smul.addr %s1473, 8
          %s1475 = scalar_lea.hbm %s10, %s1474
          %s1477 = sshll.u32 %s1467, 4
          %s1478 = int_to_ptr.vmem [resolvable:$true] %s1477
          %s1479 = sshll.u32 %s1475, 4
          %s1480 = int_to_ptr.hbm [resolvable:$true] %s1479
          %1482 = dma.vmem_to_hbm [thread:$0]  %s1478, 128, %s1480, %s1464
        $region76: #{tpu_custom_call.1} parent=59 // pred_fallthru
          _
      $region60: #{tpu_custom_call.1} parent=5 // pred_fallthru
        _
      %p1483 = scmp.le.s32.totalorder 2, %s22
      // Predicated region
      $region77: #{tpu_custom_call.1} parent=5 // pred_check
        %p1484 = pneg %p1483
      $region78: #{tpu_custom_call.1} parent=5 // pred_check_branch
        %1486 = sbr.rel (%p1484) target = $region80
      $region79: #{tpu_custom_call.1} parent=5 // pred_region
        %s1487 = ssub.s32 %s22, 2
        // Predicated region
        $region81: #{tpu_custom_call.1} parent=79 // pred_check
          %p1488 = pneg %p287
        $region82: #{tpu_custom_call.1} parent=79 // pred_check_branch
          %1490 = sbr.rel (%p1488) target = $region84
        $region83: #{tpu_custom_call.1} parent=79 // pred_region
          %s1491 = sand.u32 %s272, 1
          %s1492 = scalar_lea.sflag [#allocation3], %s1491
          %s1493 = sand.u32 %s272, 1
          %s1494 = smul.addr %s1493, 8
          %s1495 = scalar_lea.vmem [#allocation9], %s1494
          %1497 = dma.done %s1492, 128
        $region84: #{tpu_custom_call.1} parent=79 // pred_fallthru
          _
      $region80: #{tpu_custom_call.1} parent=5 // pred_fallthru
        _
    $region6: #{tpu_custom_call.1} parent=1 // loop_footer
      %s26 = sadd.s32 1, %s22
    $region7: #{tpu_custom_call.1} parent=1 // loop_footer_branch
      %21 = sbr.rel target = $region3
    $region8: #{tpu_custom_call.1} parent=1 // loop_exit
      _
    %1498 = vsyncpa [#allocation3], 1
    %s1499 = scalar_lea.sflag [#allocation3], 1
    %1500 = vsyncpa %s1499, 1
    %1501 = vsyncpa [#allocation4], 1
    %s1502 = scalar_lea.sflag [#allocation4], 1
    %1503 = vsyncpa %s1502, 1
    %1504 = vsyncpa [#allocation5], 1
    %s1505 = scalar_lea.sflag [#allocation5], 1
    %1506 = vsyncpa %s1505, 1
    %1507 = vsyncpa [#allocation8], 1

</llo_original>
